<compile_context>
chip_gen: v7x
topology: tpu7x:2x2x1
jax: 0.10.0
libtpu: 0.0.40
codegen_flags: <defaults>
</compile_context>

<pallas_src>
import functools

import jax
import jax.numpy as jnp
from jax.experimental import pallas as pl
from jax.experimental.pallas import tpu as pltpu

NEG_SLOPE = 0.01  # F.leaky_relu default negative_slope


def _leaky_relu(v):
    return jnp.where(v >= 0, v, NEG_SLOPE * v)


# --------------------------------------------------------------------------- #
# Fused Pallas kernel: both conv branches + leaky_relu + add in one pass over x
# --------------------------------------------------------------------------- #
def _fused_conv3d_kernel(mask_ref, xcur_ref, xprev_ref, xnext_ref, w_ref,
                         o_ref, xpad_ref):
    """One (batch n, time-tile t) grid step.

    mask_ref : (tT*H, 2)            [top-of-strip, bottom-of-strip] row masks
    xcur_ref : (tT, H, W*Cin)       current time tile (channels folded on lanes)
    xprev_ref: (1, H, W*Cin)        plane t0-1 (valid only when t > 0)
    xnext_ref: (1, H, W*Cin)        plane t0+tT (valid only when t < n_t-1)
    w_ref    : (9, W*Cin, 4*W*Cout) banded weights [Wg | Wl | Wl(kh==0) | Wl(kh==2)]
    o_ref    : (tT*H, W*Cout)       lane-dense output slab
    xpad_ref : (tT+2, H+2, W*Cin)   halo-padded tile (VMEM scratch)
    """
    tT, H, WC = xcur_ref.shape
    rows = tT * H
    wco = w_ref.shape[-1] // 4

    t = pl.program_id(1)
    n_t = pl.num_programs(1)

    # ---- assemble padded tile: zero only the shells that can hold stale data --
    zrow = jnp.zeros((tT + 2, 1, WC), xpad_ref.dtype)
    xpad_ref[:, 0:1, :] = zrow                 # H-border rows (all planes)
    xpad_ref[:, H + 1:H + 2, :] = zrow

    xpad_ref[1:tT + 1, 1:H + 1, :] = xcur_ref[...]   # interior

    zplane = jnp.zeros((1, H, WC), xpad_ref.dtype)

    @pl.when(t > 0)
    def _():                                   # previous time plane (halo)
        xpad_ref[0:1, 1:H + 1, :] = xprev_ref[...]

    @pl.when(t == 0)
    def _():                                   # sequence start -> zero padding
        xpad_ref[0:1, 1:H + 1, :] = zplane

    @pl.when(t < n_t - 1)
    def _():                                   # next time plane (halo)
        xpad_ref[tT + 1:tT + 2, 1:H + 1, :] = xnext_ref[...]

    @pl.when(t == n_t - 1)
    def _():                                   # sequence end -> zero padding
        xpad_ref[tT + 1:tT + 2, 1:H + 1, :] = zplane

    # ---- 9 banded (Toeplitz-in-W) matmuls, accumulated in registers.
    #      W-padding is implicit in the banded weights (out-of-range taps have
    #      no weight row), so no W halo and no per-tap lane gather is needed. ---
    acc = None
    for a in range(3):          # kt
        for b in range(3):      # kh
            slab = xpad_ref[a:a + tT, b:b + H, :].reshape(rows, WC)
            part = jnp.dot(slab, w_ref[a * 3 + b],
                           preferred_element_type=jnp.float32)
            acc = part if acc is None else acc + part

    out_g = acc[:, 0 * wco:1 * wco]
    out_l = acc[:, 1 * wco:2 * wco]
    c_top = acc[:, 2 * wco:3 * wco]   # kh==0 taps of w_dl (read row h-1)
    c_bot = acc[:, 3 * wco:4 * wco]   # kh==2 taps of w_dl (read row h+1)

    # local branch = per-H-strip conv: remove the taps crossing a strip border.
    out_l = out_l - mask_ref[:, 0:1] * c_top - mask_ref[:, 1:2] * c_bot

    # fused epilogue: leaky_relu on both branches + add; lane-dense direct store.
    res = _leaky_relu(out_g) + _leaky_relu(out_l)
    o_ref[...] = res.astype(o_ref.dtype)


# --------------------------------------------------------------------------- #
# Host-side preparation helpers
# --------------------------------------------------------------------------- #
def _prep_weights(w_dg_torch, w_dl_torch, w_width):
    """(Cout, Cin, 3, 3, 3) torch-layout weights -> banded (9, W*Cin, 4*W*Cout).

    For each (kt, kh) the kw taps are expanded into a banded (W*Cin, W*Cout)
    matrix so the W dimension rides on the matmul's output lane axis.
    """
    c_out, c_in = w_dg_torch.shape[:2]
    kh = jnp.arange(3).reshape(1, 1, 1, 3, 1)
    groups = [
        w_dg_torch,                              # global branch
        w_dl_torch,                              # local branch (full-H conv)
        jnp.where(kh == 0, w_dl_torch, 0.0),     # taps reading row h-1
        jnp.where(kh == 2, w_dl_torch, 0.0),     # taps reading row h+1
    ]
    wp = jnp.arange(w_width)[:, None]            # input column w'
    wo = jnp.arange(w_width)[None, :]            # output column w
    d = wp - wo + 1                              # kw tap index
    valid = ((d >= 0) & (d < 3)).astype(w_dg_torch.dtype)
    d_c = jnp.clip(d, 0, 2)

    bands = []
    for g in groups:
        gt = jnp.transpose(g, (2, 3, 4, 1, 0))               # (kt, kh, kw, Cin, Cout)
        band = gt[:, :, d_c]                                  # (kt, kh, W', W, Cin, Cout)
        band = band * valid[None, None, :, :, None, None]
        band = jnp.transpose(band, (0, 1, 2, 4, 3, 5))        # (kt, kh, W', Cin, W, Cout)
        bands.append(band.reshape(9, w_width * c_in, w_width * c_out))
    return jnp.concatenate(bands, axis=-1)                    # (9, W*Cin, 4*W*Cout)


def _strip_mask(h, scale, t_tile, dtype):
    hh = jnp.arange(h)
    top = (hh % scale == 0)
    bot = (hh % scale == (scale - 1))
    m = jnp.stack([top, bot], axis=-1).astype(dtype)          # (H, 2)
    return jnp.tile(m, (t_tile, 1))                           # (t_tile*H, 2)


def _vmem_limit_bytes():
    default = 48 * 1024 * 1024                 # safe inside v7x's 64 MiB VMEM
    try:
        cap = getattr(pltpu.get_tpu_info(), "vmem_capacity_bytes", None)
    except Exception:  # pragma: no cover - query unsupported on some setups
        cap = None
    if cap is None:
        return default
    return min(max(int(cap * 3 // 4), 32 * 1024 * 1024), 112 * 1024 * 1024)


def _pick_t_tile(t_len, h):
    """Largest divisor of T with matmul M = t_tile*H <= 1024."""
    best = 1
    for d in range(1, t_len + 1):
        if t_len % d == 0 and d * h <= 1024:
            best = d
    return best


# --------------------------------------------------------------------------- #
# Wrapper: SequenceBlockWrapper(BasicConv3d_p).forward
# --------------------------------------------------------------------------- #
def sequence_block_forward(x, w_dl_torch, w_dg_torch, *, p=2, t_tile=None):
    """x: [n, s, c, h, w]  ->  [n, s, planes, h, w]."""
    n, s, c_in, h, w = x.shape
    c_out = w_dl_torch.shape[0]
    assert h % p == 0, "H must be divisible by p"
    scale = h // p

    if t_tile is None:
        t_tile = _pick_t_tile(s, h)
    assert s % t_tile == 0, "T must be divisible by t_tile"
    assert (t_tile * h) % 8 == 0 or t_tile == s

    wc = w * c_in
    wco = w * c_out
    n_t = s // t_tile
    dt = x.dtype

    # wrapper rearrange 'n s c h w -> n c s h w' composed with the kernel's
    # channels-last, (W,Cin)-lane-flattened layout == one transpose + reshape.
    x_flat = jnp.transpose(x, (0, 1, 3, 4, 2)).reshape(n, s, h, wc)
    w_band = _prep_weights(w_dg_torch, w_dl_torch, w)      # (9, wc, 4*wco)
    mask = _strip_mask(h, scale, t_tile, dt)               # (t_tile*h, 2)

    out2d = pl.pallas_call(
        _fused_conv3d_kernel,
        out_shape=jax.ShapeDtypeStruct((n, s * h, wco), dt),
        grid_spec=pltpu.PrefetchScalarGridSpec(
            num_scalar_prefetch=0,
            grid=(n, n_t),
            in_specs=[
                # resident strip-boundary masks
                pl.BlockSpec((t_tile * h, 2), lambda ni, ti: (0, 0)),
                # current time tile (auto-pipelined)
                pl.BlockSpec((None, t_tile, h, wc),
                             lambda ni, ti: (ni, ti, 0, 0)),
                # previous halo plane (clamped at the sequence start; unused there)
                pl.BlockSpec((None, 1, h, wc),
                             lambda ni, ti: (ni, jnp.maximum(ti * t_tile - 1, 0),
                                             0, 0)),
                # next halo plane (clamped at the sequence end; unused there)
                pl.BlockSpec((None, 1, h, wc),
                             lambda ni, ti: (ni, jnp.minimum(ti * t_tile + t_tile,
                                                             s - 1), 0, 0)),
                # banded weights stay resident in VMEM
                pl.BlockSpec((9, wc, 4 * wco), lambda ni, ti: (0, 0, 0)),
            ],
            out_specs=pl.BlockSpec((None, t_tile * h, wco),
                                   lambda ni, ti: (ni, ti, 0)),
            scratch_shapes=[pltpu.VMEM((t_tile + 2, h + 2, wc), dt)],
        ),
        compiler_params=pltpu.CompilerParams(
            dimension_semantics=("parallel", "parallel"),
            vmem_limit_bytes=_vmem_limit_bytes(),
        ),
    )(mask, x_flat, x_flat, x_flat, w_band)

    out = out2d.reshape(n, s, h, w, c_out)
    return jnp.transpose(out, (0, 1, 4, 2, 3))              # -> [n, s, c', h, w]


# --------------------------------------------------------------------------- #
# Pure-XLA reference for the correctness check
# --------------------------------------------------------------------------- #
def _ref_conv3d(x_ncthw, w_oikkk):
    return jax.lax.conv_general_dilated(
        x_ncthw, w_oikkk, window_strides=(1, 1, 1),
        padding=((1, 1), (1, 1), (1, 1)),
        dimension_numbers=("NCDHW", "OIDHW", "NCDHW"))


def _ref_sequence_block(x_nschw, w_dl_torch, w_dg_torch, p):
    x = jnp.transpose(x_nschw, (0, 2, 1, 3, 4))             # n s c h w -> n c s h w
    h = x.shape[3]
    scale = h // p
    strips = [_ref_conv3d(x[:, :, :, i * scale:(i + 1) * scale, :], w_dl_torch)
              for i in range(p)]
    outl = jnp.concatenate(strips, axis=3)
    outg = _ref_conv3d(x, w_dg_torch)
    out = _leaky_relu(outg) + _leaky_relu(outl)
    return jnp.transpose(out, (0, 2, 1, 3, 4))              # n c s h w -> n s c h w


# --------------------------------------------------------------------------- #
if __name__ == "__main__":
    key = jax.random.PRNGKey(0)
    kx, kl, kg = jax.random.split(key, 3)

    # Small shapes: n=2, seq=8, inplanes=4, planes=8, h=w=8, kernel=3, p=2
    N, S, Cin, H, W = 2, 8, 4, 8, 8
    Cout, KERNEL, P = 8, 3, 2

    x = jax.random.normal(kx, (N, S, Cin, H, W), jnp.float32)

    # Deterministic Conv3d-style weights (PyTorch uniform bound, no bias),
    # kept in the PyTorch (out, in, kt, kh, kw) layout.
    fan_in = Cin * KERNEL ** 3
    bound = 1.0 / (fan_in ** 0.5)
    w_dl = jax.random.uniform(kl, (Cout, Cin, KERNEL, KERNEL, KERNEL),
                              jnp.float32, -bound, bound)
    w_dg = jax.random.uniform(kg, (Cout, Cin, KERNEL, KERNEL, KERNEL),
                              jnp.float32, -bound, bound)

    ref = _ref_sequence_block(x, w_dl, w_dg, P)

    # Tiled over T: exercises both halo-copy paths (prev and next planes).
    fwd = jax.jit(functools.partial(sequence_block_forward, p=P, t_tile=4))
    out = jax.block_until_ready(fwd(x, w_dl, w_dg))
    assert out.shape == (N, S, Cout, H, W)
    assert jnp.allclose(out, ref, atol=1e-4, rtol=1e-4), "mismatch (t_tile=4)"

    # Single-tile (auto t_tile) configuration: exercises the zero-halo path.
    fwd_auto = jax.jit(functools.partial(sequence_block_forward, p=P))
    out_auto = jax.block_until_ready(fwd_auto(x, w_dl, w_dg))
    assert jnp.allclose(out_auto, ref, atol=1e-4, rtol=1e-4), "mismatch (auto tile)"

    print("KERNEL_OK")
</pallas_src>

<mosaic_0001>
module attributes {stable_mosaic.version = 11 : i64} {
  func.func @_fused_conv3d_kernel(%arg0: i32, %arg1: i32, %arg2: memref<32x2xf32, #tpu.memory_space<vmem>>, %arg3: memref<1x4x8x32xf32, #tpu.memory_space<vmem>>, %arg4: memref<1x1x8x32xf32, #tpu.memory_space<vmem>>, %arg5: memref<1x1x8x32xf32, #tpu.memory_space<vmem>>, %arg6: memref<9x32x256xf32, #tpu.memory_space<vmem>>, %arg7: memref<1x32x64xf32, #tpu.memory_space<vmem>>, %arg8: memref<6x10x32xf32, #tpu.memory_space<vmem>>) attributes {dimension_semantics = [#tpu.dimension_semantics<parallel>, #tpu.dimension_semantics<parallel>], iteration_bounds = array<i64: 2, 2>, scalar_prefetch = 0 : i64, scratch_operands = 1 : i64, tpu.core_type = #tpu.core_type<tc>, window_params = [{pipeline_mode = #tpu.pipeline_mode<synchronous>, transform_indices = @transform_0, window_bounds = array<i64: 32, 2>}, {transform_indices = @transform_1, window_bounds = array<i64: 1, 4, 8, 32>}, {transform_indices = @transform_2, window_bounds = array<i64: 1, 1, 8, 32>}, {transform_indices = @transform_3, window_bounds = array<i64: 1, 1, 8, 32>}, {pipeline_mode = #tpu.pipeline_mode<synchronous>, transform_indices = @transform_4, window_bounds = array<i64: 9, 32, 256>}, {transform_indices = @transform_5, window_bounds = array<i64: 1, 32, 64>}]} {
    %cst = arith.constant 0.000000e+00 : f32
    %0 = vector.broadcast %cst : f32 to vector<6x1x32xf32>
    %c0 = arith.constant 0 : index
    %c0_0 = arith.constant 0 : index
    %c0_1 = arith.constant 0 : index
    %1 = vector.load %arg8[%c0, %c0_0, %c0_1] : memref<6x10x32xf32, #tpu.memory_space<vmem>>, vector<6x1x32xf32>
    tpu.vector_store %arg8[%c0, %c0_0, %c0_1], %0 {strides = array<i32>} : memref<6x10x32xf32, #tpu.memory_space<vmem>>, vector<6x1x32xf32>,
    %c0_2 = arith.constant 0 : index
    %c9 = arith.constant 9 : index
    %c0_3 = arith.constant 0 : index
    %2 = vector.load %arg8[%c0_2, %c9, %c0_3] : memref<6x10x32xf32, #tpu.memory_space<vmem>>, vector<6x1x32xf32>
    tpu.vector_store %arg8[%c0_2, %c9, %c0_3], %0 {strides = array<i32>} : memref<6x10x32xf32, #tpu.memory_space<vmem>>, vector<6x1x32xf32>,
    %c0_4 = arith.constant 0 : index
    %c0_5 = arith.constant 0 : index
    %c0_6 = arith.constant 0 : index
    %c0_7 = arith.constant 0 : index
    %3 = vector.load %arg3[%c0_4, %c0_5, %c0_6, %c0_7] : memref<1x4x8x32xf32, #tpu.memory_space<vmem>>, vector<1x4x8x32xf32>
    %4 = vector.shape_cast %3 : vector<1x4x8x32xf32> to vector<4x8x32xf32>
    %c1 = arith.constant 1 : index
    %c1_8 = arith.constant 1 : index
    %c0_9 = arith.constant 0 : index
    %5 = vector.load %arg8[%c1, %c1_8, %c0_9] : memref<6x10x32xf32, #tpu.memory_space<vmem>>, vector<4x8x32xf32>
    tpu.vector_store %arg8[%c1, %c1_8, %c0_9], %4 {strides = array<i32>} : memref<6x10x32xf32, #tpu.memory_space<vmem>>, vector<4x8x32xf32>,
    %cst_10 = arith.constant 0.000000e+00 : f32
    %6 = vector.broadcast %cst_10 : f32 to vector<1x8x32xf32>
    %c0_i32 = arith.constant 0 : i32
    %7 = arith.cmpi sgt, %arg1, %c0_i32 : i32
    %8 = arith.extui %7 : i1 to i32
    %c0_i32_11 = arith.constant 0 : i32
    %9 = arith.cmpi ne, %8, %c0_i32_11 : i32
    scf.if %9 {
      %c0_84 = arith.constant 0 : index
      %c0_85 = arith.constant 0 : index
      %c0_86 = arith.constant 0 : index
      %c0_87 = arith.constant 0 : index
      %98 = vector.load %arg4[%c0_84, %c0_85, %c0_86, %c0_87] : memref<1x1x8x32xf32, #tpu.memory_space<vmem>>, vector<1x1x8x32xf32>
      %99 = vector.shape_cast %98 : vector<1x1x8x32xf32> to vector<1x8x32xf32>
      %c0_88 = arith.constant 0 : index
      %c1_89 = arith.constant 1 : index
      %c0_90 = arith.constant 0 : index
      %100 = vector.load %arg8[%c0_88, %c1_89, %c0_90] : memref<6x10x32xf32, #tpu.memory_space<vmem>>, vector<1x8x32xf32>
      tpu.vector_store %arg8[%c0_88, %c1_89, %c0_90], %99 {strides = array<i32>} : memref<6x10x32xf32, #tpu.memory_space<vmem>>, vector<1x8x32xf32>,
    } else {
    }
    %c0_i32_12 = arith.constant 0 : i32
    %10 = arith.cmpi eq, %arg1, %c0_i32_12 : i32
    %11 = arith.extui %10 : i1 to i32
    %c0_i32_13 = arith.constant 0 : i32
    %12 = arith.cmpi ne, %11, %c0_i32_13 : i32
    scf.if %12 {
      %c0_84 = arith.constant 0 : index
      %c1_85 = arith.constant 1 : index
      %c0_86 = arith.constant 0 : index
      %98 = vector.load %arg8[%c0_84, %c1_85, %c0_86] : memref<6x10x32xf32, #tpu.memory_space<vmem>>, vector<1x8x32xf32>
      tpu.vector_store %arg8[%c0_84, %c1_85, %c0_86], %6 {strides = array<i32>} : memref<6x10x32xf32, #tpu.memory_space<vmem>>, vector<1x8x32xf32>,
    } else {
    }
    %c1_i32 = arith.constant 1 : i32
    %13 = arith.cmpi slt, %arg1, %c1_i32 : i32
    %14 = arith.extui %13 : i1 to i32
    %c0_i32_14 = arith.constant 0 : i32
    %15 = arith.cmpi ne, %14, %c0_i32_14 : i32
    scf.if %15 {
      %c0_84 = arith.constant 0 : index
      %c0_85 = arith.constant 0 : index
      %c0_86 = arith.constant 0 : index
      %c0_87 = arith.constant 0 : index
      %98 = vector.load %arg5[%c0_84, %c0_85, %c0_86, %c0_87] : memref<1x1x8x32xf32, #tpu.memory_space<vmem>>, vector<1x1x8x32xf32>
      %99 = vector.shape_cast %98 : vector<1x1x8x32xf32> to vector<1x8x32xf32>
      %c5_88 = arith.constant 5 : index
      %c1_89 = arith.constant 1 : index
      %c0_90 = arith.constant 0 : index
      %100 = vector.load %arg8[%c5_88, %c1_89, %c0_90] : memref<6x10x32xf32, #tpu.memory_space<vmem>>, vector<1x8x32xf32>
      tpu.vector_store %arg8[%c5_88, %c1_89, %c0_90], %99 {strides = array<i32>} : memref<6x10x32xf32, #tpu.memory_space<vmem>>, vector<1x8x32xf32>,
    } else {
    }
    %c1_i32_15 = arith.constant 1 : i32
    %16 = arith.cmpi eq, %arg1, %c1_i32_15 : i32
    %17 = arith.extui %16 : i1 to i32
    %c0_i32_16 = arith.constant 0 : i32
    %18 = arith.cmpi ne, %17, %c0_i32_16 : i32
    scf.if %18 {
      %c5_84 = arith.constant 5 : index
      %c1_85 = arith.constant 1 : index
      %c0_86 = arith.constant 0 : index
      %98 = vector.load %arg8[%c5_84, %c1_85, %c0_86] : memref<6x10x32xf32, #tpu.memory_space<vmem>>, vector<1x8x32xf32>
      tpu.vector_store %arg8[%c5_84, %c1_85, %c0_86], %6 {strides = array<i32>} : memref<6x10x32xf32, #tpu.memory_space<vmem>>, vector<1x8x32xf32>,
    } else {
    }
    %c0_17 = arith.constant 0 : index
    %c0_18 = arith.constant 0 : index
    %c0_19 = arith.constant 0 : index
    %19 = vector.load %arg8[%c0_17, %c0_18, %c0_19] : memref<6x10x32xf32, #tpu.memory_space<vmem>>, vector<4x8x32xf32>
    %20 = vector.shape_cast %19 : vector<4x8x32xf32> to vector<32x32xf32>
    %c0_20 = arith.constant 0 : index
    %c0_21 = arith.constant 0 : index
    %c0_22 = arith.constant 0 : index
    %21 = vector.load %arg6[%c0_20, %c0_21, %c0_22] : memref<9x32x256xf32, #tpu.memory_space<vmem>>, vector<1x32x256xf32>
    %22 = vector.shape_cast %21 : vector<1x32x256xf32> to vector<32x256xf32>
    %cst_23 = arith.constant dense<0.000000e+00> : vector<32x256xf32>
    %23 = tpu.matmul %20, %22, %cst_23 {dimension_numbers = #tpu.dot_dimension_numbers<[1], [0], [0], [1], [0, 0, 1, 1], [], []>} : vector<32x32xf32>, vector<32x256xf32>, vector<32x256xf32> -> vector<32x256xf32>
    %c0_24 = arith.constant 0 : index
    %c1_25 = arith.constant 1 : index
    %c0_26 = arith.constant 0 : index
    %24 = vector.load %arg8[%c0_24, %c1_25, %c0_26] : memref<6x10x32xf32, #tpu.memory_space<vmem>>, vector<4x8x32xf32>
    %25 = vector.shape_cast %24 : vector<4x8x32xf32> to vector<32x32xf32>
    %c1_27 = arith.constant 1 : index
    %c0_28 = arith.constant 0 : index
    %c0_29 = arith.constant 0 : index
    %26 = vector.load %arg6[%c1_27, %c0_28, %c0_29] : memref<9x32x256xf32, #tpu.memory_space<vmem>>, vector<1x32x256xf32>
    %27 = vector.shape_cast %26 : vector<1x32x256xf32> to vector<32x256xf32>
    %cst_30 = arith.constant dense<0.000000e+00> : vector<32x256xf32>
    %28 = tpu.matmul %25, %27, %cst_30 {dimension_numbers = #tpu.dot_dimension_numbers<[1], [0], [0], [1], [0, 0, 1, 1], [], []>} : vector<32x32xf32>, vector<32x256xf32>, vector<32x256xf32> -> vector<32x256xf32>
    %29 = arith.addf %23, %28 : vector<32x256xf32>
    %c0_31 = arith.constant 0 : index
    %c2 = arith.constant 2 : index
    %c0_32 = arith.constant 0 : index
    %30 = vector.load %arg8[%c0_31, %c2, %c0_32] : memref<6x10x32xf32, #tpu.memory_space<vmem>>, vector<4x8x32xf32>
    %31 = vector.shape_cast %30 : vector<4x8x32xf32> to vector<32x32xf32>
    %c2_33 = arith.constant 2 : index
    %c0_34 = arith.constant 0 : index
    %c0_35 = arith.constant 0 : index
    %32 = vector.load %arg6[%c2_33, %c0_34, %c0_35] : memref<9x32x256xf32, #tpu.memory_space<vmem>>, vector<1x32x256xf32>
    %33 = vector.shape_cast %32 : vector<1x32x256xf32> to vector<32x256xf32>
    %cst_36 = arith.constant dense<0.000000e+00> : vector<32x256xf32>
    %34 = tpu.matmul %31, %33, %cst_36 {dimension_numbers = #tpu.dot_dimension_numbers<[1], [0], [0], [1], [0, 0, 1, 1], [], []>} : vector<32x32xf32>, vector<32x256xf32>, vector<32x256xf32> -> vector<32x256xf32>
    %35 = arith.addf %29, %34 : vector<32x256xf32>
    %c1_37 = arith.constant 1 : index
    %c0_38 = arith.constant 0 : index
    %c0_39 = arith.constant 0 : index
    %36 = vector.load %arg8[%c1_37, %c0_38, %c0_39] : memref<6x10x32xf32, #tpu.memory_space<vmem>>, vector<4x8x32xf32>
    %37 = vector.shape_cast %36 : vector<4x8x32xf32> to vector<32x32xf32>
    %c3 = arith.constant 3 : index
    %c0_40 = arith.constant 0 : index
    %c0_41 = arith.constant 0 : index
    %38 = vector.load %arg6[%c3, %c0_40, %c0_41] : memref<9x32x256xf32, #tpu.memory_space<vmem>>, vector<1x32x256xf32>
    %39 = vector.shape_cast %38 : vector<1x32x256xf32> to vector<32x256xf32>
    %cst_42 = arith.constant dense<0.000000e+00> : vector<32x256xf32>
    %40 = tpu.matmul %37, %39, %cst_42 {dimension_numbers = #tpu.dot_dimension_numbers<[1], [0], [0], [1], [0, 0, 1, 1], [], []>} : vector<32x32xf32>, vector<32x256xf32>, vector<32x256xf32> -> vector<32x256xf32>
    %41 = arith.addf %35, %40 : vector<32x256xf32>
    %c1_43 = arith.constant 1 : index
    %c1_44 = arith.constant 1 : index
    %c0_45 = arith.constant 0 : index
    %42 = vector.load %arg8[%c1_43, %c1_44, %c0_45] : memref<6x10x32xf32, #tpu.memory_space<vmem>>, vector<4x8x32xf32>
    %43 = vector.shape_cast %42 : vector<4x8x32xf32> to vector<32x32xf32>
    %c4 = arith.constant 4 : index
    %c0_46 = arith.constant 0 : index
    %c0_47 = arith.constant 0 : index
    %44 = vector.load %arg6[%c4, %c0_46, %c0_47] : memref<9x32x256xf32, #tpu.memory_space<vmem>>, vector<1x32x256xf32>
    %45 = vector.shape_cast %44 : vector<1x32x256xf32> to vector<32x256xf32>
    %cst_48 = arith.constant dense<0.000000e+00> : vector<32x256xf32>
    %46 = tpu.matmul %43, %45, %cst_48 {dimension_numbers = #tpu.dot_dimension_numbers<[1], [0], [0], [1], [0, 0, 1, 1], [], []>} : vector<32x32xf32>, vector<32x256xf32>, vector<32x256xf32> -> vector<32x256xf32>
    %47 = arith.addf %41, %46 : vector<32x256xf32>
    %c1_49 = arith.constant 1 : index
    %c2_50 = arith.constant 2 : index
    %c0_51 = arith.constant 0 : index
    %48 = vector.load %arg8[%c1_49, %c2_50, %c0_51] : memref<6x10x32xf32, #tpu.memory_space<vmem>>, vector<4x8x32xf32>
    %49 = vector.shape_cast %48 : vector<4x8x32xf32> to vector<32x32xf32>
    %c5 = arith.constant 5 : index
    %c0_52 = arith.constant 0 : index
    %c0_53 = arith.constant 0 : index
    %50 = vector.load %arg6[%c5, %c0_52, %c0_53] : memref<9x32x256xf32, #tpu.memory_space<vmem>>, vector<1x32x256xf32>
    %51 = vector.shape_cast %50 : vector<1x32x256xf32> to vector<32x256xf32>
    %cst_54 = arith.constant dense<0.000000e+00> : vector<32x256xf32>
    %52 = tpu.matmul %49, %51, %cst_54 {dimension_numbers = #tpu.dot_dimension_numbers<[1], [0], [0], [1], [0, 0, 1, 1], [], []>} : vector<32x32xf32>, vector<32x256xf32>, vector<32x256xf32> -> vector<32x256xf32>
    %53 = arith.addf %47, %52 : vector<32x256xf32>
    %c2_55 = arith.constant 2 : index
    %c0_56 = arith.constant 0 : index
    %c0_57 = arith.constant 0 : index
    %54 = vector.load %arg8[%c2_55, %c0_56, %c0_57] : memref<6x10x32xf32, #tpu.memory_space<vmem>>, vector<4x8x32xf32>
    %55 = vector.shape_cast %54 : vector<4x8x32xf32> to vector<32x32xf32>
    %c6 = arith.constant 6 : index
    %c0_58 = arith.constant 0 : index
    %c0_59 = arith.constant 0 : index
    %56 = vector.load %arg6[%c6, %c0_58, %c0_59] : memref<9x32x256xf32, #tpu.memory_space<vmem>>, vector<1x32x256xf32>
    %57 = vector.shape_cast %56 : vector<1x32x256xf32> to vector<32x256xf32>
    %cst_60 = arith.constant dense<0.000000e+00> : vector<32x256xf32>
    %58 = tpu.matmul %55, %57, %cst_60 {dimension_numbers = #tpu.dot_dimension_numbers<[1], [0], [0], [1], [0, 0, 1, 1], [], []>} : vector<32x32xf32>, vector<32x256xf32>, vector<32x256xf32> -> vector<32x256xf32>
    %59 = arith.addf %53, %58 : vector<32x256xf32>
    %c2_61 = arith.constant 2 : index
    %c1_62 = arith.constant 1 : index
    %c0_63 = arith.constant 0 : index
    %60 = vector.load %arg8[%c2_61, %c1_62, %c0_63] : memref<6x10x32xf32, #tpu.memory_space<vmem>>, vector<4x8x32xf32>
    %61 = vector.shape_cast %60 : vector<4x8x32xf32> to vector<32x32xf32>
    %c7 = arith.constant 7 : index
    %c0_64 = arith.constant 0 : index
    %c0_65 = arith.constant 0 : index
    %62 = vector.load %arg6[%c7, %c0_64, %c0_65] : memref<9x32x256xf32, #tpu.memory_space<vmem>>, vector<1x32x256xf32>
    %63 = vector.shape_cast %62 : vector<1x32x256xf32> to vector<32x256xf32>
    %cst_66 = arith.constant dense<0.000000e+00> : vector<32x256xf32>
    %64 = tpu.matmul %61, %63, %cst_66 {dimension_numbers = #tpu.dot_dimension_numbers<[1], [0], [0], [1], [0, 0, 1, 1], [], []>} : vector<32x32xf32>, vector<32x256xf32>, vector<32x256xf32> -> vector<32x256xf32>
    %65 = arith.addf %59, %64 : vector<32x256xf32>
    %c2_67 = arith.constant 2 : index
    %c2_68 = arith.constant 2 : index
    %c0_69 = arith.constant 0 : index
    %66 = vector.load %arg8[%c2_67, %c2_68, %c0_69] : memref<6x10x32xf32, #tpu.memory_space<vmem>>, vector<4x8x32xf32>
    %67 = vector.shape_cast %66 : vector<4x8x32xf32> to vector<32x32xf32>
    %c8 = arith.constant 8 : index
    %c0_70 = arith.constant 0 : index
    %c0_71 = arith.constant 0 : index
    %68 = vector.load %arg6[%c8, %c0_70, %c0_71] : memref<9x32x256xf32, #tpu.memory_space<vmem>>, vector<1x32x256xf32>
    %69 = vector.shape_cast %68 : vector<1x32x256xf32> to vector<32x256xf32>
    %cst_72 = arith.constant dense<0.000000e+00> : vector<32x256xf32>
    %70 = tpu.matmul %67, %69, %cst_72 {dimension_numbers = #tpu.dot_dimension_numbers<[1], [0], [0], [1], [0, 0, 1, 1], [], []>} : vector<32x32xf32>, vector<32x256xf32>, vector<32x256xf32> -> vector<32x256xf32>
    %71 = arith.addf %65, %70 : vector<32x256xf32>
    %72 = vector.extract_strided_slice %71 {offsets = [0, 0], sizes = [32, 64], strides = [1, 1]} : vector<32x256xf32> to vector<32x64xf32>
    %73 = vector.extract_strided_slice %71 {offsets = [0, 64], sizes = [32, 64], strides = [1, 1]} : vector<32x256xf32> to vector<32x64xf32>
    %74 = vector.extract_strided_slice %71 {offsets = [0, 128], sizes = [32, 64], strides = [1, 1]} : vector<32x256xf32> to vector<32x64xf32>
    %75 = vector.extract_strided_slice %71 {offsets = [0, 192], sizes = [32, 64], strides = [1, 1]} : vector<32x256xf32> to vector<32x64xf32>
    %c0_73 = arith.constant 0 : index
    %c0_74 = arith.constant 0 : index
    %76 = vector.load %arg2[%c0_73, %c0_74] : memref<32x2xf32, #tpu.memory_space<vmem>>, vector<32x1xf32>
    %77 = vector.broadcast %76 : vector<32x1xf32> to vector<32x64xf32>
    %78 = arith.mulf %77, %74 : vector<32x64xf32>
    %79 = arith.subf %73, %78 : vector<32x64xf32>
    %c0_75 = arith.constant 0 : index
    %c1_76 = arith.constant 1 : index
    %80 = vector.load %arg2[%c0_75, %c1_76] : memref<32x2xf32, #tpu.memory_space<vmem>>, vector<32x1xf32>
    %81 = vector.broadcast %80 : vector<32x1xf32> to vector<32x64xf32>
    %82 = arith.mulf %81, %75 : vector<32x64xf32>
    %83 = arith.subf %79, %82 : vector<32x64xf32>
    %cst_77 = arith.constant 0.000000e+00 : f32
    %84 = vector.broadcast %cst_77 : f32 to vector<32x64xf32>
    %85 = arith.cmpf oge, %72, %84 : vector<32x64xf32>
    %cst_78 = arith.constant 0.00999999977 : f32
    %86 = vector.broadcast %cst_78 : f32 to vector<32x64xf32>
    %87 = arith.mulf %86, %72 : vector<32x64xf32>
    %88 = arith.select %85, %72, %87 : vector<32x64xi1>, vector<32x64xf32>
    %cst_79 = arith.constant 0.000000e+00 : f32
    %89 = vector.broadcast %cst_79 : f32 to vector<32x64xf32>
    %90 = arith.cmpf oge, %83, %89 : vector<32x64xf32>
    %cst_80 = arith.constant 0.00999999977 : f32
    %91 = vector.broadcast %cst_80 : f32 to vector<32x64xf32>
    %92 = arith.mulf %91, %83 : vector<32x64xf32>
    %93 = arith.select %90, %83, %92 : vector<32x64xi1>, vector<32x64xf32>
    %94 = arith.addf %88, %93 : vector<32x64xf32>
    %c0_81 = arith.constant 0 : index
    %c0_82 = arith.constant 0 : index
    %c0_83 = arith.constant 0 : index
    %95 = vector.load %arg7[%c0_81, %c0_82, %c0_83] : memref<1x32x64xf32, #tpu.memory_space<vmem>>, vector<1x32x64xf32>
    %96 = vector.shape_cast %95 : vector<1x32x64xf32> to vector<32x64xf32>
    %97 = vector.shape_cast %94 : vector<32x64xf32> to vector<1x32x64xf32>
    tpu.vector_store %arg7[%c0_81, %c0_82, %c0_83], %97 {strides = array<i32>} : memref<1x32x64xf32, #tpu.memory_space<vmem>>, vector<1x32x64xf32>,
    return
  }
  func.func @transform_0(%arg0: i32, %arg1: i32) -> (i32, i32) {
    %c0_i32 = arith.constant 0 : i32
    %c0_i32_0 = arith.constant 0 : i32
    %c0_i32_1 = arith.constant 0 : i32
    return %c0_i32, %c0_i32_0 : i32, i32
  }
  func.func @transform_1(%arg0: i32, %arg1: i32) -> (i32, i32, i32, i32) {
    %c0_i32 = arith.constant 0 : i32
    %c0_i32_0 = arith.constant 0 : i32
    %c0_i32_1 = arith.constant 0 : i32
    return %arg0, %arg1, %c0_i32, %c0_i32_0 : i32, i32, i32, i32
  }
  func.func @transform_2(%arg0: i32, %arg1: i32) -> (i32, i32, i32, i32) {
    %c4_i32 = arith.constant 4 : i32
    %0 = arith.muli %arg1, %c4_i32 : i32
    %c1_i32 = arith.constant 1 : i32
    %1 = arith.subi %0, %c1_i32 : i32
    %c0_i32 = arith.constant 0 : i32
    %2 = arith.maxsi %1, %c0_i32 : i32
    %c0_i32_0 = arith.constant 0 : i32
    %c0_i32_1 = arith.constant 0 : i32
    %c0_i32_2 = arith.constant 0 : i32
    return %arg0, %2, %c0_i32_0, %c0_i32_1 : i32, i32, i32, i32
  }
  func.func @transform_3(%arg0: i32, %arg1: i32) -> (i32, i32, i32, i32) {
    %c4_i32 = arith.constant 4 : i32
    %0 = arith.muli %arg1, %c4_i32 : i32
    %c4_i32_0 = arith.constant 4 : i32
    %1 = arith.addi %0, %c4_i32_0 : i32
    %c7_i32 = arith.constant 7 : i32
    %2 = arith.minsi %1, %c7_i32 : i32
    %c0_i32 = arith.constant 0 : i32
    %c0_i32_1 = arith.constant 0 : i32
    %c0_i32_2 = arith.constant 0 : i32
    return %arg0, %2, %c0_i32, %c0_i32_1 : i32, i32, i32, i32
  }
  func.func @transform_4(%arg0: i32, %arg1: i32) -> (i32, i32, i32) {
    %c0_i32 = arith.constant 0 : i32
    %c0_i32_0 = arith.constant 0 : i32
    %c0_i32_1 = arith.constant 0 : i32
    %c0_i32_2 = arith.constant 0 : i32
    return %c0_i32, %c0_i32_0, %c0_i32_1 : i32, i32, i32
  }
  func.func @transform_5(%arg0: i32, %arg1: i32) -> (i32, i32, i32) {
    %c0_i32 = arith.constant 0 : i32
    %c0_i32_0 = arith.constant 0 : i32
    return %arg0, %arg1, %c0_i32 : i32, i32, i32
  }
}

</mosaic_0001>

<llo_original>
// kernel: sequence_block_forward.1
$region0: #{sequence_block_forward.1}
  #allocation0 [shape = 'u32[]', space=smem, size = 0x4, offset = 0x4, fixed_abs, tag = 'smem constant byte address 0x4 - core index']
  #allocation1 [shape = 'u32[144,128]{1,0:T(1,128)}', space=vmem, size = 0x12000, scoped, tag = 'internal scratch']
  #allocation2 [shape = 'f32[6,10,32]{2,1,0:T(8,128)}', space=vmem, size = 0xc000, scoped, tag = 'scratch operand']
  %s0 = inlined_call_operand.vmem [shape: f32[32,2], index: 0, kind: input, shape index: {}]
  %s1 = inlined_call_operand.vmem [shape: f32[2,8,8,32], index: 1, kind: input, shape index: {}, may-alias: {1,2,3}]
  %s2 = inlined_call_operand.vmem [shape: f32[2,8,8,32], index: 2, kind: input, shape index: {}, may-alias: {1,2,3}]
  %s3 = inlined_call_operand.vmem [shape: f32[2,8,8,32], index: 3, kind: input, shape index: {}, may-alias: {1,2,3}]
  %s4 = inlined_call_operand.vmem [shape: f32[9,32,256], index: 4, kind: input, shape index: {}]
  %s5 = inlined_call_operand.vmem [shape: f32[2,64,64], index: 5, kind: output, shape index: {}]
  %s6 = sld [smem:[#allocation0]]
  $region69: #{sequence_block_forward.1} parent=0
    _
  %s8 = ssub.s32 1, %s6
  %s9 = scalar_select 0, %s8, %s6
  loop: start=0, step=1, limit=6
  $region2: #{sequence_block_forward.1} parent=0 // loop_pre_header
    _
  $region3: #{sequence_block_forward.1} parent=0 // loop_header
    %s11 = sphi 0, %s15
    %p12 = scmp.ge.s32.totalorder %s11, 6
    %s18 = sphi 0, %s30
    %s19 = sphi 0, %s26
    %s20 = sphi 0, %s18
    %s21 = sphi 0, %s19
    %s22 = sphi 0, %s20
    %s23 = sphi 0, %s21
    %s31 = sphi 0, %s31
    %s33 = sphi 0, %s31
    %s34 = sphi 0, %s33
    %s48 = sphi 0, %s34
    %s56 = sphi 0, %s58
    %s59 = sphi 0, %s56
    %s60 = sphi 0, %s59
    %s76 = sphi 0, %s60
    %s92 = sphi 0, %s94
    %s95 = sphi 0, %s92
    %s96 = sphi 0, %s95
    %s112 = sphi 0, %s96
    %s128 = sphi 0, %s130
    %s131 = sphi 0, %s128
    %s132 = sphi 0, %s131
    %s148 = sphi 0, %s132
    %s152 = sphi 0, %s152
    %s154 = sphi 0, %s152
    %s155 = sphi 0, %s154
    %s169 = sphi 0, %s155
    %s177 = sphi 0, %s179
    %s180 = sphi 0, %s177
    %s181 = sphi 0, %s180
    %s197 = sphi 0, %s181
  $region4: #{sequence_block_forward.1} parent=0 // loop_header_branch
    %14 = sbr.rel (%p12) target = $region8
  $region5: #{sequence_block_forward.1} parent=0 // loop_body
    %s16 = ssub.s32 %s11, 1
    %s17 = ssub.s32 %s11, 2
    %s24 = sadd.s32 1, %s19
    %p25 = scmp.ge.s32.totalorder %s24, 2
    %s26 = scalar_select %p25, 0, %s24
    %s27 = sadd.s32 1, %s18
    %s28 = scalar_select %p25, %s27, %s18
    %p29 = scmp.ge.s32.totalorder %s28, 2
    %s30 = scalar_select %p29, 0, %s28
    %s32 = sadd.s32 %s31, 1
    %p35 = scmp.eq.s32.totalorder %s11, 3
    %p36 = scmp.ne.s32.totalorder %s31, %s33
    %p37 = scmp.eq.s32.totalorder %s11, 0
    %p38 = por %p36, %p37
    %p39 = scmp.ne.s32.totalorder %s31, %s33
    %p40 = scmp.eq.s32.totalorder %s16, 3
    %p41 = por %p39, %p40
    %p42 = scmp.ne.s32.totalorder %s33, %s34
    %p43 = scmp.eq.s32.totalorder %s16, 0
    %p44 = por %p42, %p43
    %p45 = scmp.ne.s32.totalorder %s33, %s34
    %p46 = scmp.eq.s32.totalorder %s17, 3
    %p47 = por %p45, %p46
    %p49 = scmp.ne.s32.totalorder %s34, %s48
    %p50 = scmp.eq.s32.totalorder %s17, 0
    %p51 = por %p49, %p50
    %s52 = ssub.s32 %s18, %s30
    %s53 = ssub.s32 %s19, %s26
    %s54 = sor.u32 %s52, %s53
    %p55 = scmp.eq.s32.totalorder %s54, 0
    %s57 = sadd.s32 %s56, 1
    %s58 = scalar_select %p55, %s56, %s57
    %p61 = pneg %p55
    %p62 = scmp.eq.s32.totalorder %s11, 3
    %p63 = por %p61, %p62
    %p64 = scmp.ne.s32.totalorder %s56, %s59
    %p65 = scmp.eq.s32.totalorder %s11, 0
    %p66 = por %p64, %p65
    %p67 = scmp.ne.s32.totalorder %s56, %s59
    %p68 = scmp.eq.s32.totalorder %s16, 3
    %p69 = por %p67, %p68
    %p70 = scmp.ne.s32.totalorder %s59, %s60
    %p71 = scmp.eq.s32.totalorder %s16, 0
    %p72 = por %p70, %p71
    %p73 = scmp.ne.s32.totalorder %s59, %s60
    %p74 = scmp.eq.s32.totalorder %s17, 3
    %p75 = por %p73, %p74
    %p77 = scmp.ne.s32.totalorder %s60, %s76
    %p78 = scmp.eq.s32.totalorder %s17, 0
    %p79 = por %p77, %p78
    %s80 = smul.u32 %s19, 4
    %s81 = ssub.s32 %s80, 1
    %p82 = scmp.gt.s32.totalorder %s81, 0
    %s83 = scalar_select %p82, %s81, 0
    %s84 = smul.u32 %s26, 4
    %s85 = ssub.s32 %s84, 1
    %p86 = scmp.gt.s32.totalorder %s85, 0
    %s87 = scalar_select %p86, %s85, 0
    %s88 = ssub.s32 %s18, %s30
    %s89 = ssub.s32 %s83, %s87
    %s90 = sor.u32 %s88, %s89
    %p91 = scmp.eq.s32.totalorder %s90, 0
    %s93 = sadd.s32 %s92, 1
    %s94 = scalar_select %p91, %s92, %s93
    %p97 = pneg %p91
    %p98 = scmp.eq.s32.totalorder %s11, 3
    %p99 = por %p97, %p98
    %p100 = scmp.ne.s32.totalorder %s92, %s95
    %p101 = scmp.eq.s32.totalorder %s11, 0
    %p102 = por %p100, %p101
    %p103 = scmp.ne.s32.totalorder %s92, %s95
    %p104 = scmp.eq.s32.totalorder %s16, 3
    %p105 = por %p103, %p104
    %p106 = scmp.ne.s32.totalorder %s95, %s96
    %p107 = scmp.eq.s32.totalorder %s16, 0
    %p108 = por %p106, %p107
    %p109 = scmp.ne.s32.totalorder %s95, %s96
    %p110 = scmp.eq.s32.totalorder %s17, 3
    %p111 = por %p109, %p110
    %p113 = scmp.ne.s32.totalorder %s96, %s112
    %p114 = scmp.eq.s32.totalorder %s17, 0
    %p115 = por %p113, %p114
    %s116 = smul.u32 %s19, 4
    %s117 = sadd.s32 %s116, 4
    %p118 = scmp.lt.s32.totalorder %s117, 7
    %s119 = scalar_select %p118, %s117, 7
    %s120 = smul.u32 %s26, 4
    %s121 = sadd.s32 %s120, 4
    %p122 = scmp.lt.s32.totalorder %s121, 7
    %s123 = scalar_select %p122, %s121, 7
    %s124 = ssub.s32 %s18, %s30
    %s125 = ssub.s32 %s119, %s123
    %s126 = sor.u32 %s124, %s125
    %p127 = scmp.eq.s32.totalorder %s126, 0
    %s129 = sadd.s32 %s128, 1
    %s130 = scalar_select %p127, %s128, %s129
    %p133 = pneg %p127
    %p134 = scmp.eq.s32.totalorder %s11, 3
    %p135 = por %p133, %p134
    %p136 = scmp.ne.s32.totalorder %s128, %s131
    %p137 = scmp.eq.s32.totalorder %s11, 0
    %p138 = por %p136, %p137
    %p139 = scmp.ne.s32.totalorder %s128, %s131
    %p140 = scmp.eq.s32.totalorder %s16, 3
    %p141 = por %p139, %p140
    %p142 = scmp.ne.s32.totalorder %s131, %s132
    %p143 = scmp.eq.s32.totalorder %s16, 0
    %p144 = por %p142, %p143
    %p145 = scmp.ne.s32.totalorder %s131, %s132
    %p146 = scmp.eq.s32.totalorder %s17, 3
    %p147 = por %p145, %p146
    %p149 = scmp.ne.s32.totalorder %s132, %s148
    %p150 = scmp.eq.s32.totalorder %s17, 0
    %p151 = por %p149, %p150
    %s153 = sadd.s32 %s152, 1
    %p156 = scmp.eq.s32.totalorder %s11, 3
    %p157 = scmp.ne.s32.totalorder %s152, %s154
    %p158 = scmp.eq.s32.totalorder %s11, 0
    %p159 = por %p157, %p158
    %p160 = scmp.ne.s32.totalorder %s152, %s154
    %p161 = scmp.eq.s32.totalorder %s16, 3
    %p162 = por %p160, %p161
    %p163 = scmp.ne.s32.totalorder %s154, %s155
    %p164 = scmp.eq.s32.totalorder %s16, 0
    %p165 = por %p163, %p164
    %p166 = scmp.ne.s32.totalorder %s154, %s155
    %p167 = scmp.eq.s32.totalorder %s17, 3
    %p168 = por %p166, %p167
    %p170 = scmp.ne.s32.totalorder %s155, %s169
    %p171 = scmp.eq.s32.totalorder %s17, 0
    %p172 = por %p170, %p171
    %s173 = ssub.s32 %s18, %s30
    %s174 = ssub.s32 %s19, %s26
    %s175 = sor.u32 %s173, %s174
    %p176 = scmp.eq.s32.totalorder %s175, 0
    %s178 = sadd.s32 %s177, 1
    %s179 = scalar_select %p176, %s177, %s178
    %p182 = pneg %p176
    %p183 = scmp.eq.s32.totalorder %s11, 3
    %p184 = por %p182, %p183
    %p185 = scmp.ne.s32.totalorder %s177, %s180
    %p186 = scmp.eq.s32.totalorder %s11, 0
    %p187 = por %p185, %p186
    %p188 = scmp.ne.s32.totalorder %s177, %s180
    %p189 = scmp.eq.s32.totalorder %s16, 3
    %p190 = por %p188, %p189
    %p191 = scmp.ne.s32.totalorder %s180, %s181
    %p192 = scmp.eq.s32.totalorder %s16, 0
    %p193 = por %p191, %p192
    %p194 = scmp.ne.s32.totalorder %s180, %s181
    %p195 = scmp.eq.s32.totalorder %s17, 3
    %p196 = por %p194, %p195
    %p198 = scmp.ne.s32.totalorder %s181, %s197
    %p199 = scmp.eq.s32.totalorder %s17, 0
    %p200 = por %p198, %p199
    %p201 = scmp.le.s32.totalorder 1, %s11
    %p202 = scmp.lt.s32.totalorder %s11, 5
    %p203 = pnand %p201, %p202
    %p204 = pneg %p203
    // Predicated region
    $region9: #{sequence_block_forward.1} parent=5 // pred_check
      _
    $region10: #{sequence_block_forward.1} parent=5 // pred_check_branch
      %206 = sbr.rel (%p203) target = $region12
    $region11: #{sequence_block_forward.1} parent=5 // pred_region
      %s207 = ssub.s32 %s11, 1
      // Predicated region
      $region13: #{sequence_block_forward.1} parent=11 // pred_check
        %p208 = pneg %p44
      $region14: #{sequence_block_forward.1} parent=11 // pred_check_branch
        %210 = sbr.rel (%p208) target = $region16
      $region15: #{sequence_block_forward.1} parent=11 // pred_region
        _
      $region16: #{sequence_block_forward.1} parent=11 // pred_fallthru
        _
      // Predicated region
      $region17: #{sequence_block_forward.1} parent=11 // pred_check
        %p211 = pneg %p165
      $region18: #{sequence_block_forward.1} parent=11 // pred_check_branch
        %213 = sbr.rel (%p211) target = $region20
      $region19: #{sequence_block_forward.1} parent=11 // pred_region
        _
      $region20: #{sequence_block_forward.1} parent=11 // pred_fallthru
        _
    $region12: #{sequence_block_forward.1} parent=5 // pred_fallthru
      _
    %p214 = scmp.lt.s32.totalorder %s11, 4
    // Predicated region
    $region21: #{sequence_block_forward.1} parent=5 // pred_check
      %p215 = pneg %p214
    $region22: #{sequence_block_forward.1} parent=5 // pred_check_branch
      %217 = sbr.rel (%p215) target = $region24
    $region23: #{sequence_block_forward.1} parent=5 // pred_region
      // Predicated region
      $region25: #{sequence_block_forward.1} parent=23 // pred_check
        %p218 = pneg %p66
      $region26: #{sequence_block_forward.1} parent=23 // pred_check_branch
        %220 = sbr.rel (%p218) target = $region28
      $region27: #{sequence_block_forward.1} parent=23 // pred_region
        %s221 = smul.u32 4, %s19
        %p222 = scmp.lt.s32.totalorder %s18, 1
        %s223 = scalar_select %p222, %s18, 1
        %p224 = scmp.lt.s32.totalorder %s221, 7
        %s225 = scalar_select %p224, %s221, 7
        %s226 = smul.addr %s223, 8
        %s227 = sadd.s32 %s225, %s226
        %s228 = smul.addr %s227, 8
        %s229 = scalar_lea.vmem %s1, %s228
        %s230 = smul.u32 4, %s19
      $region28: #{sequence_block_forward.1} parent=23 // pred_fallthru
        _
      // Predicated region
      $region29: #{sequence_block_forward.1} parent=23 // pred_check
        %p231 = pneg %p102
      $region30: #{sequence_block_forward.1} parent=23 // pred_check_branch
        %233 = sbr.rel (%p231) target = $region32
      $region31: #{sequence_block_forward.1} parent=23 // pred_region
        %s234 = smul.u32 %s19, 4
        %s235 = ssub.s32 %s234, 1
        %p236 = scmp.gt.s32.totalorder %s235, 0
        %s237 = scalar_select %p236, %s235, 0
        %p238 = scmp.lt.s32.totalorder %s18, 1
        %s239 = scalar_select %p238, %s18, 1
        %p240 = scmp.lt.s32.totalorder %s237, 7
        %s241 = scalar_select %p240, %s237, 7
        %s242 = smul.addr %s239, 8
        %s243 = sadd.s32 %s241, %s242
        %s244 = smul.addr %s243, 8
        %s245 = scalar_lea.vmem %s2, %s244
        %s246 = smul.u32 %s19, 4
        %s247 = ssub.s32 %s246, 1
        %p248 = scmp.gt.s32.totalorder %s247, 0
        %s249 = scalar_select %p248, %s247, 0
      $region32: #{sequence_block_forward.1} parent=23 // pred_fallthru
        _
      // Predicated region
      $region33: #{sequence_block_forward.1} parent=23 // pred_check
        %p250 = pneg %p138
      $region34: #{sequence_block_forward.1} parent=23 // pred_check_branch
        %252 = sbr.rel (%p250) target = $region36
      $region35: #{sequence_block_forward.1} parent=23 // pred_region
        %s253 = smul.u32 %s19, 4
        %s254 = sadd.s32 %s253, 4
        %p255 = scmp.lt.s32.totalorder %s254, 7
        %s256 = scalar_select %p255, %s254, 7
        %p257 = scmp.lt.s32.totalorder %s18, 1
        %s258 = scalar_select %p257, %s18, 1
        %p259 = scmp.lt.s32.totalorder %s256, 7
        %s260 = scalar_select %p259, %s256, 7
        %s261 = smul.addr %s258, 8
        %s262 = sadd.s32 %s260, %s261
        %s263 = smul.addr %s262, 8
        %s264 = scalar_lea.vmem %s3, %s263
        %s265 = smul.u32 %s19, 4
        %s266 = sadd.s32 %s265, 4
        %p267 = scmp.lt.s32.totalorder %s266, 7
        %s268 = scalar_select %p267, %s266, 7
      $region36: #{sequence_block_forward.1} parent=23 // pred_fallthru
        _
    $region24: #{sequence_block_forward.1} parent=5 // pred_fallthru
      _
    %p269 = scmp.le.s32.totalorder 1, %s11
    %p270 = scmp.lt.s32.totalorder %s11, 5
    %p271 = pnand %p269, %p270
    %p272 = pneg %p271
    // Predicated region
    $region37: #{sequence_block_forward.1} parent=5 // pred_check
      _
    $region38: #{sequence_block_forward.1} parent=5 // pred_check_branch
      %274 = sbr.rel (%p271) target = $region40
    $region39: #{sequence_block_forward.1} parent=5 // pred_region
      %s275 = ssub.s32 %s11, 1
      %p276 = pneg %p44
      %p277 = pneg %p41
      %s278 = smul.u32 4, %s21
      %p279 = scmp.lt.s32.totalorder %s20, 1
      %s280 = scalar_select %p279, %s20, 1
      %p281 = scmp.lt.s32.totalorder %s278, 7
      %s282 = scalar_select %p281, %s278, 7
      %s283 = smul.addr %s280, 8
      %s284 = sadd.s32 %s282, %s283
      %s285 = smul.addr %s284, 8
      %s286 = scalar_lea.vmem %s1, %s285
      %p287 = pneg %p72
      %p288 = pneg %p69
      %s289 = smul.u32 %s21, 4
      %s290 = ssub.s32 %s289, 1
      %p291 = scmp.gt.s32.totalorder %s290, 0
      %s292 = scalar_select %p291, %s290, 0
      %p293 = scmp.lt.s32.totalorder %s20, 1
      %s294 = scalar_select %p293, %s20, 1
      %p295 = scmp.lt.s32.totalorder %s292, 7
      %s296 = scalar_select %p295, %s292, 7
      %s297 = smul.addr %s294, 8
      %s298 = sadd.s32 %s296, %s297
      %s299 = smul.addr %s298, 8
      %s300 = scalar_lea.vmem %s2, %s299
      %p301 = pneg %p108
      %p302 = pneg %p105
      %s303 = smul.u32 %s21, 4
      %s304 = sadd.s32 %s303, 4
      %p305 = scmp.lt.s32.totalorder %s304, 7
      %s306 = scalar_select %p305, %s304, 7
      %p307 = scmp.lt.s32.totalorder %s20, 1
      %s308 = scalar_select %p307, %s20, 1
      %p309 = scmp.lt.s32.totalorder %s306, 7
      %s310 = scalar_select %p309, %s306, 7
      %s311 = smul.addr %s308, 8
      %s312 = sadd.s32 %s310, %s311
      %s313 = smul.addr %s312, 8
      %s314 = scalar_lea.vmem %s3, %s313
      %p315 = pneg %p144
      %p316 = pneg %p141
      %p317 = pneg %p165
      %p318 = pneg %p162
      %p319 = pneg %p193
      %p320 = pneg %p190
      %s321 = smul.u32 4, %s21
      %p322 = scmp.lt.s32.totalorder %s20, 1
      %s323 = scalar_select %p322, %s20, 1
      %p324 = scmp.lt.s32.totalorder %s321, 7
      %s325 = scalar_select %p324, %s321, 7
      %s326 = smul.addr %s323, 8
      %s327 = sadd.s32 %s325, %s326
      %s328 = smul.addr %s327, 8
      %s329 = scalar_lea.vmem %s5, %s328
      %s330 = smul.u32 4, %s21
      %p331 = scmp.lt.s32.totalorder %s20, 1
      %s332 = scalar_select %p331, %s20, 1
      %p333 = scmp.lt.s32.totalorder %s330, 7
      %s334 = scalar_select %p333, %s330, 7
      %s335 = smul.addr %s332, 8
      %s336 = sadd.s32 %s334, %s335
      %s337 = smul.addr %s336, 8
      %s338 = scalar_lea.vmem %s1, %s337
      %s339 = smul.u32 4, %s21
      %s340 = smul.u32 %s21, 4
      %s341 = ssub.s32 %s340, 1
      %p342 = scmp.gt.s32.totalorder %s341, 0
      %s343 = scalar_select %p342, %s341, 0
      %p344 = scmp.lt.s32.totalorder %s20, 1
      %s345 = scalar_select %p344, %s20, 1
      %p346 = scmp.lt.s32.totalorder %s343, 7
      %s347 = scalar_select %p346, %s343, 7
      %s348 = smul.addr %s345, 8
      %s349 = sadd.s32 %s347, %s348
      %s350 = smul.addr %s349, 8
      %s351 = scalar_lea.vmem %s2, %s350
      %s352 = smul.u32 %s21, 4
      %s353 = ssub.s32 %s352, 1
      %p354 = scmp.gt.s32.totalorder %s353, 0
      %s355 = scalar_select %p354, %s353, 0
      %s356 = smul.u32 %s21, 4
      %s357 = sadd.s32 %s356, 4
      %p358 = scmp.lt.s32.totalorder %s357, 7
      %s359 = scalar_select %p358, %s357, 7
      %p360 = scmp.lt.s32.totalorder %s20, 1
      %s361 = scalar_select %p360, %s20, 1
      %p362 = scmp.lt.s32.totalorder %s359, 7
      %s363 = scalar_select %p362, %s359, 7
      %s364 = smul.addr %s361, 8
      %s365 = sadd.s32 %s363, %s364
      %s366 = smul.addr %s365, 8
      %s367 = scalar_lea.vmem %s3, %s366
      %s368 = smul.u32 %s21, 4
      %s369 = sadd.s32 %s368, 4
      %p370 = scmp.lt.s32.totalorder %s369, 7
      %s371 = scalar_select %p370, %s369, 7
      %s372 = smul.u32 4, %s21
      %p373 = scmp.lt.s32.totalorder %s20, 1
      %s374 = scalar_select %p373, %s20, 1
      %p375 = scmp.lt.s32.totalorder %s372, 7
      %s376 = scalar_select %p375, %s372, 7
      %s377 = smul.addr %s374, 8
      %s378 = sadd.s32 %s376, %s377
      %s379 = smul.addr %s378, 8
      %s380 = scalar_lea.vmem %s5, %s379
      %s381 = smul.u32 4, %s21
      %vm382 = vcmask 253952
      %383 = vst.msk [vmem:[#allocation2] sm:$0x1] %vm382, 0.0
      %384 = vst.msk [vmem:[#allocation2 + $0x10] sm:$0x1] %vm382, 0.0
      %385 = vst.msk [vmem:[#allocation2 + $0x20] sm:$0x1] %vm382, 0.0
      %386 = vst.msk [vmem:[#allocation2 + $0x30] sm:$0x1] %vm382, 0.0
      %387 = vst.msk [vmem:[#allocation2 + $0x40] sm:$0x1] %vm382, 0.0
      %388 = vst.msk [vmem:[#allocation2 + $0x50] sm:$0x1] %vm382, 0.0
      %389 = vst.msk [vmem:[#allocation2 + $0x9] sm:$0x1] %vm382, 0.0
      %390 = vst.msk [vmem:[#allocation2 + $0x19] sm:$0x1] %vm382, 0.0
      %391 = vst.msk [vmem:[#allocation2 + $0x29] sm:$0x1] %vm382, 0.0
      %392 = vst.msk [vmem:[#allocation2 + $0x39] sm:$0x1] %vm382, 0.0
      %393 = vst.msk [vmem:[#allocation2 + $0x49] sm:$0x1] %vm382, 0.0
      %394 = vst.msk [vmem:[#allocation2 + $0x59] sm:$0x1] %vm382, 0.0
      %v395 = vld [vmem:[%s338] sm:$0xff]
      %v396 = vld [vmem:[%s338 + $0x8] sm:$0xff]
      %v397 = vld [vmem:[%s338 + $0x10] sm:$0xff]
      %v398 = vld [vmem:[%s338 + $0x18] sm:$0xff]
      %s399 = scalar_lea.vmem [#allocation2], 16
      %vm400 = vcmask 261120
      %401 = vst.msk [vmem:[%s399 + $0x1] sm:$0xff] %vm400, %v395
      %402 = vst.msk [vmem:[%s399 + $0x11] sm:$0xff] %vm400, %v396
      %403 = vst.msk [vmem:[%s399 + $0x21] sm:$0xff] %vm400, %v397
      %404 = vst.msk [vmem:[%s399 + $0x31] sm:$0xff] %vm400, %v398
      %p405 = scmp.gt.s32.totalorder %s21, 0
      // Predicated region
      $region41: #{sequence_block_forward.1} parent=39 // pred_check
        %p406 = pneg %p405
      $region42: #{sequence_block_forward.1} parent=39 // pred_check_branch
        %408 = sbr.rel (%p406) target = $region44
      $region43: #{sequence_block_forward.1} parent=39 // pred_region
        %v409 = vld [vmem:[%s351] sm:$0xff]
        %410 = vst.msk [vmem:[#allocation2 + $0x1] sm:$0xff] %vm400, %v409
      $region44: #{sequence_block_forward.1} parent=39 // pred_fallthru
        _
      %p411 = scmp.eq.s32.totalorder %s21, 0
      // Predicated region
      $region45: #{sequence_block_forward.1} parent=39 // pred_check
        %p412 = pneg %p411
      $region46: #{sequence_block_forward.1} parent=39 // pred_check_branch
        %414 = sbr.rel (%p412) target = $region48
      $region47: #{sequence_block_forward.1} parent=39 // pred_region
        %415 = vst.msk [vmem:[#allocation2 + $0x1] sm:$0xff] %vm400, 0.0
      $region48: #{sequence_block_forward.1} parent=39 // pred_fallthru
        _
      %p416 = scmp.lt.s32.totalorder %s21, 1
      // Predicated region
      $region49: #{sequence_block_forward.1} parent=39 // pred_check
        %p417 = pneg %p416
      $region50: #{sequence_block_forward.1} parent=39 // pred_check_branch
        %419 = sbr.rel (%p417) target = $region52
      $region51: #{sequence_block_forward.1} parent=39 // pred_region
        %v420 = vld [vmem:[%s367] sm:$0xff]
        %s421 = scalar_lea.vmem [#allocation2], 80
        %422 = vst.msk [vmem:[%s421 + $0x1] sm:$0xff] %vm400, %v420
      $region52: #{sequence_block_forward.1} parent=39 // pred_fallthru
        _
      %p423 = scmp.eq.s32.totalorder %s21, 1
      // Predicated region
      $region53: #{sequence_block_forward.1} parent=39 // pred_check
        %p424 = pneg %p423
      $region54: #{sequence_block_forward.1} parent=39 // pred_check_branch
        %426 = sbr.rel (%p424) target = $region56
      $region55: #{sequence_block_forward.1} parent=39 // pred_region
        %s427 = scalar_lea.vmem [#allocation2], 80
        %428 = vst.msk [vmem:[%s427 + $0x1] sm:$0xff] %vm400, 0.0
      $region56: #{sequence_block_forward.1} parent=39 // pred_fallthru
        _
      %v429 = vld [vmem:[#allocation2] sm:$0xff]
      %v430 = vld [vmem:[#allocation2 + $0x10] sm:$0xff]
      %v431 = vld [vmem:[#allocation2 + $0x20] sm:$0xff]
      %v432 = vld [vmem:[#allocation2 + $0x30] sm:$0xff]
      %v433 = vld [vmem:[%s4] sm:$0xff]
      %v434 = vld [vmem:[%s4 + $0x8] sm:$0xff]
      %v435 = vld [vmem:[%s4 + $0x10] sm:$0xff]
      %v436 = vld [vmem:[%s4 + $0x18] sm:$0xff]
      %v437 = vld [vmem:[%s4 + $0x20] sm:$0xff]
      %v438 = vld [vmem:[%s4 + $0x28] sm:$0xff]
      %v439 = vld [vmem:[%s4 + $0x30] sm:$0xff]
      %v440 = vld [vmem:[%s4 + $0x38] sm:$0xff]
      %v441 = vld [vmem:[#allocation2 + $0x1] sm:$0xff]
      %v442 = vld [vmem:[#allocation2 + $0x11] sm:$0xff]
      %v443 = vld [vmem:[#allocation2 + $0x21] sm:$0xff]
      %v444 = vld [vmem:[#allocation2 + $0x31] sm:$0xff]
      %s445 = scalar_lea.vmem %s4, 64
      %v446 = vld [vmem:[%s445] sm:$0xff]
      %v447 = vld [vmem:[%s445 + $0x8] sm:$0xff]
      %v448 = vld [vmem:[%s445 + $0x10] sm:$0xff]
      %v449 = vld [vmem:[%s445 + $0x18] sm:$0xff]
      %v450 = vld [vmem:[%s445 + $0x20] sm:$0xff]
      %v451 = vld [vmem:[%s445 + $0x28] sm:$0xff]
      %v452 = vld [vmem:[%s445 + $0x30] sm:$0xff]
      %v453 = vld [vmem:[%s445 + $0x38] sm:$0xff]
      %v455 = vsel %vm400, %v441, 0
      %v458 = vsel %vm400, %v442, 0
      %v461 = vsel %vm400, %v443, 0
      %v464 = vsel %vm400, %v444, 0
      %466 = vmatprep.subr.mxu0 %v447
      %467 = vmatpush1.msra.mxu0 %v446
      %468 = vmatprep.subr.mxu0 %v449
      %469 = vmatpush1.msra.mxu0 %v448
      %470 = vmatprep.subr.mxu0 %v451
      %471 = vmatpush1.msra.mxu0 %v450
      %472 = vmatprep.subr.mxu0 %v453
      %473 = vmatpush1.msra.mxu0 %v452
      %474 = vmatprep.subr.mxu0 0.0
      %475 = vmatpush1.msra.mxu0 0.0
      %476 = vmatprep.subr.mxu0 0.0
      %477 = vmatpush1.msra.mxu0 0.0
      %478 = vmatprep.subr.mxu0 0.0
      %479 = vmatpush1.msra.mxu0 0.0
      %480 = vmatprep.subr.mxu0 0.0
      %481 = vmatpush1.msra.mxu0 0.0
      %482 = vmatprep.subr.mxu0 0.0
      %483 = vmatpush1.msra.mxu0 0.0
      %484 = vmatprep.subr.mxu0 0.0
      %485 = vmatpush1.msra.mxu0 0.0
      %486 = vmatprep.subr.mxu0 0.0
      %487 = vmatpush1.msra.mxu0 0.0
      %488 = vmatprep.subr.mxu0 0.0
      %489 = vmatpush1.msra.mxu0 0.0
      %490 = vmatprep.subr.mxu0 0.0
      %491 = vmatpush1.msra.mxu0 0.0
      %492 = vmatprep.subr.mxu0 0.0
      %493 = vmatpush1.msra.mxu0 0.0
      %494 = vmatprep.subr.mxu0 0.0
      %495 = vmatpush1.msra.mxu0 0.0
      %496 = vmatprep.subr.mxu0 0.0
      %497 = vmatpush1.msra.mxu0 0.0
      %498 = vmatprep.subr.mxu0 0.0
      %499 = vmatpush1.msra.mxu0 0.0
      %500 = vmatprep.subr.mxu0 0.0
      %501 = vmatpush1.msra.mxu0 0.0
      %502 = vmatprep.subr.mxu0 0.0
      %503 = vmatpush1.msra.mxu0 0.0
      %504 = vmatprep.subr.mxu0 0.0
      %505 = vmatpush1.msra.mxu0 0.0
      %506 = vmatprep.subr.mxu0 0.0
      %507 = vmatpush1.msra.mxu0 0.0
      %508 = vmatprep.subr.mxu0 0.0
      %509 = vmatpush1.msra.mxu0 0.0
      %510 = vmatprep.subr.mxu0 0.0
      %511 = vmatpush1.msra.mxu0 0.0
      %512 = vmatprep.subr.mxu0 0.0
      %513 = vmatpush1.msra.mxu0 0.0
      %514 = vmatprep.subr.mxu0 0.0
      %515 = vmatpush1.msra.mxu0 0.0
      %516 = vmatprep.subr.mxu0 0.0
      %517 = vmatpush1.msra.mxu0 0.0
      %518 = vmatprep.subr.mxu0 0.0
      %519 = vmatpush1.msra.mxu0 0.0
      %520 = vmatprep.subr.mxu0 0.0
      %521 = vmatpush1.msra.mxu0 0.0
      %522 = vmatprep.subr.mxu0 0.0
      %523 = vmatpush1.msra.mxu0 0.0
      %524 = vmatprep.subr.mxu0 0.0
      %525 = vmatpush1.msra.mxu0 0.0
      %526 = vmatprep.subr.mxu0 0.0
      %527 = vmatpush1.msra.mxu0 0.0
      %528 = vmatprep.subr.mxu0 0.0
      %529 = vmatpush1.msra.mxu0 0.0
      %530 = vmatprep.mubr.f32.mxu0 0.0
      %531 = vmatmul.mubr.f32.gmra.mrb[0].mxu0 %v455
      %v532 = vpop.f32.mrb[0].mxu0
      %v533 = vadd.f32 0.0, %v532
      %v534 = vpop.f32.mrb[0].mxu0
      %v535 = vadd.f32 0.0, %v534
      %536 = vmatprep.mubr.f32.mxu0 0.0
      %537 = vmatmul.mubr.f32.gmra.mrb[0].mxu0 %v458
      %v538 = vpop.f32.mrb[0].mxu0
      %v539 = vadd.f32 0.0, %v538
      %v540 = vpop.f32.mrb[0].mxu0
      %v541 = vadd.f32 0.0, %v540
      %542 = vmatprep.mubr.f32.mxu0 0.0
      %543 = vmatmul.mubr.f32.gmra.mrb[0].mxu0 %v461
      %v544 = vpop.f32.mrb[0].mxu0
      %v545 = vadd.f32 0.0, %v544
      %v546 = vpop.f32.mrb[0].mxu0
      %v547 = vadd.f32 0.0, %v546
      %548 = vmatprep.mubr.f32.mxu0 0.0
      %549 = vmatmul.mubr.f32.gmra.mrb[0].mxu0 %v464
      %v550 = vpop.f32.mrb[0].mxu0
      %v551 = vadd.f32 0.0, %v550
      %v552 = vpop.f32.mrb[0].mxu0
      %v553 = vadd.f32 0.0, %v552
      %554 = vdwg.mxu0
      %v556 = vsel %vm400, %v429, 0
      %v559 = vsel %vm400, %v430, 0
      %v562 = vsel %vm400, %v431, 0
      %v565 = vsel %vm400, %v432, 0
      %567 = vmatprep.subr.mxu0 %v434
      %568 = vmatpush1.msra.mxu0 %v433
      %569 = vmatprep.subr.mxu0 %v436
      %570 = vmatpush1.msra.mxu0 %v435
      %571 = vmatprep.subr.mxu0 %v438
      %572 = vmatpush1.msra.mxu0 %v437
      %573 = vmatprep.subr.mxu0 %v440
      %574 = vmatpush1.msra.mxu0 %v439
      %575 = vmatprep.subr.mxu0 0.0
      %576 = vmatpush1.msra.mxu0 0.0
      %577 = vmatprep.subr.mxu0 0.0
      %578 = vmatpush1.msra.mxu0 0.0
      %579 = vmatprep.subr.mxu0 0.0
      %580 = vmatpush1.msra.mxu0 0.0
      %581 = vmatprep.subr.mxu0 0.0
      %582 = vmatpush1.msra.mxu0 0.0
      %583 = vmatprep.subr.mxu0 0.0
      %584 = vmatpush1.msra.mxu0 0.0
      %585 = vmatprep.subr.mxu0 0.0
      %586 = vmatpush1.msra.mxu0 0.0
      %587 = vmatprep.subr.mxu0 0.0
      %588 = vmatpush1.msra.mxu0 0.0
      %589 = vmatprep.subr.mxu0 0.0
      %590 = vmatpush1.msra.mxu0 0.0
      %591 = vmatprep.subr.mxu0 0.0
      %592 = vmatpush1.msra.mxu0 0.0
      %593 = vmatprep.subr.mxu0 0.0
      %594 = vmatpush1.msra.mxu0 0.0
      %595 = vmatprep.subr.mxu0 0.0
      %596 = vmatpush1.msra.mxu0 0.0
      %597 = vmatprep.subr.mxu0 0.0
      %598 = vmatpush1.msra.mxu0 0.0
      %599 = vmatprep.subr.mxu0 0.0
      %600 = vmatpush1.msra.mxu0 0.0
      %601 = vmatprep.subr.mxu0 0.0
      %602 = vmatpush1.msra.mxu0 0.0
      %603 = vmatprep.subr.mxu0 0.0
      %604 = vmatpush1.msra.mxu0 0.0
      %605 = vmatprep.subr.mxu0 0.0
      %606 = vmatpush1.msra.mxu0 0.0
      %607 = vmatprep.subr.mxu0 0.0
      %608 = vmatpush1.msra.mxu0 0.0
      %609 = vmatprep.subr.mxu0 0.0
      %610 = vmatpush1.msra.mxu0 0.0
      %611 = vmatprep.subr.mxu0 0.0
      %612 = vmatpush1.msra.mxu0 0.0
      %613 = vmatprep.subr.mxu0 0.0
      %614 = vmatpush1.msra.mxu0 0.0
      %615 = vmatprep.subr.mxu0 0.0
      %616 = vmatpush1.msra.mxu0 0.0
      %617 = vmatprep.subr.mxu0 0.0
      %618 = vmatpush1.msra.mxu0 0.0
      %619 = vmatprep.subr.mxu0 0.0
      %620 = vmatpush1.msra.mxu0 0.0
      %621 = vmatprep.subr.mxu0 0.0
      %622 = vmatpush1.msra.mxu0 0.0
      %623 = vmatprep.subr.mxu0 0.0
      %624 = vmatpush1.msra.mxu0 0.0
      %625 = vmatprep.subr.mxu0 0.0
      %626 = vmatpush1.msra.mxu0 0.0
      %627 = vmatprep.subr.mxu0 0.0
      %628 = vmatpush1.msra.mxu0 0.0
      %629 = vmatprep.subr.mxu0 0.0
      %630 = vmatpush1.msra.mxu0 0.0
      %631 = vmatprep.mubr.f32.mxu0 0.0
      %632 = vmatmul.mubr.f32.gmra.mrb[0].mxu0 %v556
      %v633 = vpop.f32.mrb[0].mxu0
      %v634 = vadd.f32 %v533, %v633
      %v635 = vpop.f32.mrb[0].mxu0
      %v636 = vadd.f32 %v535, %v635
      %637 = vmatprep.mubr.f32.mxu0 0.0
      %638 = vmatmul.mubr.f32.gmra.mrb[0].mxu0 %v559
      %v639 = vpop.f32.mrb[0].mxu0
      %v640 = vadd.f32 %v539, %v639
      %v641 = vpop.f32.mrb[0].mxu0
      %v642 = vadd.f32 %v541, %v641
      %643 = vmatprep.mubr.f32.mxu0 0.0
      %644 = vmatmul.mubr.f32.gmra.mrb[0].mxu0 %v562
      %v645 = vpop.f32.mrb[0].mxu0
      %v646 = vadd.f32 %v545, %v645
      %v647 = vpop.f32.mrb[0].mxu0
      %v648 = vadd.f32 %v547, %v647
      %649 = vmatprep.mubr.f32.mxu0 0.0
      %650 = vmatmul.mubr.f32.gmra.mrb[0].mxu0 %v565
      %v651 = vpop.f32.mrb[0].mxu0
      %v652 = vadd.f32 %v551, %v651
      %v653 = vpop.f32.mrb[0].mxu0
      %v654 = vadd.f32 %v553, %v653
      %655 = vdwg.mxu0
      %v656 = vld [vmem:[#allocation2 + $0x2] sm:$0xff]
      %v657 = vld [vmem:[#allocation2 + $0x12] sm:$0xff]
      %v658 = vld [vmem:[#allocation2 + $0x22] sm:$0xff]
      %v659 = vld [vmem:[#allocation2 + $0x32] sm:$0xff]
      %s660 = scalar_lea.vmem %s4, 128
      %v661 = vld [vmem:[%s660] sm:$0xff]
      %v662 = vld [vmem:[%s660 + $0x8] sm:$0xff]
      %v663 = vld [vmem:[%s660 + $0x10] sm:$0xff]
      %v664 = vld [vmem:[%s660 + $0x18] sm:$0xff]
      %v665 = vld [vmem:[%s660 + $0x20] sm:$0xff]
      %v666 = vld [vmem:[%s660 + $0x28] sm:$0xff]
      %v667 = vld [vmem:[%s660 + $0x30] sm:$0xff]
      %v668 = vld [vmem:[%s660 + $0x38] sm:$0xff]
      %v670 = vsel %vm400, %v656, 0
      %v673 = vsel %vm400, %v657, 0
      %v676 = vsel %vm400, %v658, 0
      %v679 = vsel %vm400, %v659, 0
      %681 = vmatprep.subr.mxu0 %v662
      %682 = vmatpush1.msra.mxu0 %v661
      %683 = vmatprep.subr.mxu0 %v664
      %684 = vmatpush1.msra.mxu0 %v663
      %685 = vmatprep.subr.mxu0 %v666
      %686 = vmatpush1.msra.mxu0 %v665
      %687 = vmatprep.subr.mxu0 %v668
      %688 = vmatpush1.msra.mxu0 %v667
      %689 = vmatprep.subr.mxu0 0.0
      %690 = vmatpush1.msra.mxu0 0.0
      %691 = vmatprep.subr.mxu0 0.0
      %692 = vmatpush1.msra.mxu0 0.0
      %693 = vmatprep.subr.mxu0 0.0
      %694 = vmatpush1.msra.mxu0 0.0
      %695 = vmatprep.subr.mxu0 0.0
      %696 = vmatpush1.msra.mxu0 0.0
      %697 = vmatprep.subr.mxu0 0.0
      %698 = vmatpush1.msra.mxu0 0.0
      %699 = vmatprep.subr.mxu0 0.0
      %700 = vmatpush1.msra.mxu0 0.0
      %701 = vmatprep.subr.mxu0 0.0
      %702 = vmatpush1.msra.mxu0 0.0
      %703 = vmatprep.subr.mxu0 0.0
      %704 = vmatpush1.msra.mxu0 0.0
      %705 = vmatprep.subr.mxu0 0.0
      %706 = vmatpush1.msra.mxu0 0.0
      %707 = vmatprep.subr.mxu0 0.0
      %708 = vmatpush1.msra.mxu0 0.0
      %709 = vmatprep.subr.mxu0 0.0
      %710 = vmatpush1.msra.mxu0 0.0
      %711 = vmatprep.subr.mxu0 0.0
      %712 = vmatpush1.msra.mxu0 0.0
      %713 = vmatprep.subr.mxu0 0.0
      %714 = vmatpush1.msra.mxu0 0.0
      %715 = vmatprep.subr.mxu0 0.0
      %716 = vmatpush1.msra.mxu0 0.0
      %717 = vmatprep.subr.mxu0 0.0
      %718 = vmatpush1.msra.mxu0 0.0
      %719 = vmatprep.subr.mxu0 0.0
      %720 = vmatpush1.msra.mxu0 0.0
      %721 = vmatprep.subr.mxu0 0.0
      %722 = vmatpush1.msra.mxu0 0.0
      %723 = vmatprep.subr.mxu0 0.0
      %724 = vmatpush1.msra.mxu0 0.0
      %725 = vmatprep.subr.mxu0 0.0
      %726 = vmatpush1.msra.mxu0 0.0
      %727 = vmatprep.subr.mxu0 0.0
      %728 = vmatpush1.msra.mxu0 0.0
      %729 = vmatprep.subr.mxu0 0.0
      %730 = vmatpush1.msra.mxu0 0.0
      %731 = vmatprep.subr.mxu0 0.0
      %732 = vmatpush1.msra.mxu0 0.0
      %733 = vmatprep.subr.mxu0 0.0
      %734 = vmatpush1.msra.mxu0 0.0
      %735 = vmatprep.subr.mxu0 0.0
      %736 = vmatpush1.msra.mxu0 0.0
      %737 = vmatprep.subr.mxu0 0.0
      %738 = vmatpush1.msra.mxu0 0.0
      %739 = vmatprep.subr.mxu0 0.0
      %740 = vmatpush1.msra.mxu0 0.0
      %741 = vmatprep.subr.mxu0 0.0
      %742 = vmatpush1.msra.mxu0 0.0
      %743 = vmatprep.subr.mxu0 0.0
      %744 = vmatpush1.msra.mxu0 0.0
      %745 = vmatprep.mubr.f32.mxu0 0.0
      %746 = vmatmul.mubr.f32.gmra.mrb[0].mxu0 %v670
      %v747 = vpop.f32.mrb[0].mxu0
      %v748 = vadd.f32 0.0, %v747
      %v749 = vpop.f32.mrb[0].mxu0
      %v750 = vadd.f32 0.0, %v749
      %751 = vmatprep.mubr.f32.mxu0 0.0
      %752 = vmatmul.mubr.f32.gmra.mrb[0].mxu0 %v673
      %v753 = vpop.f32.mrb[0].mxu0
      %v754 = vadd.f32 0.0, %v753
      %v755 = vpop.f32.mrb[0].mxu0
      %v756 = vadd.f32 0.0, %v755
      %757 = vmatprep.mubr.f32.mxu0 0.0
      %758 = vmatmul.mubr.f32.gmra.mrb[0].mxu0 %v676
      %v759 = vpop.f32.mrb[0].mxu0
      %v760 = vadd.f32 0.0, %v759
      %v761 = vpop.f32.mrb[0].mxu0
      %v762 = vadd.f32 0.0, %v761
      %763 = vmatprep.mubr.f32.mxu0 0.0
      %764 = vmatmul.mubr.f32.gmra.mrb[0].mxu0 %v679
      %v765 = vpop.f32.mrb[0].mxu0
      %v766 = vadd.f32 0.0, %v765
      %v767 = vpop.f32.mrb[0].mxu0
      %v768 = vadd.f32 0.0, %v767
      %769 = vdwg.mxu0
      %v770 = vadd.f32 %v634, %v748
      %v771 = vadd.f32 %v636, %v750
      %v772 = vadd.f32 %v640, %v754
      %v773 = vadd.f32 %v642, %v756
      %v774 = vadd.f32 %v646, %v760
      %v775 = vadd.f32 %v648, %v762
      %v776 = vadd.f32 %v652, %v766
      %v777 = vadd.f32 %v654, %v768
      %v778 = vld [vmem:[%s399] sm:$0xff]
      %v779 = vld [vmem:[%s399 + $0x10] sm:$0xff]
      %v780 = vld [vmem:[%s399 + $0x20] sm:$0xff]
      %v781 = vld [vmem:[%s399 + $0x30] sm:$0xff]
      %s782 = scalar_lea.vmem %s4, 192
      %v783 = vld [vmem:[%s782] sm:$0xff]
      %v784 = vld [vmem:[%s782 + $0x8] sm:$0xff]
      %v785 = vld [vmem:[%s782 + $0x10] sm:$0xff]
      %v786 = vld [vmem:[%s782 + $0x18] sm:$0xff]
      %v787 = vld [vmem:[%s782 + $0x20] sm:$0xff]
      %v788 = vld [vmem:[%s782 + $0x28] sm:$0xff]
      %v789 = vld [vmem:[%s782 + $0x30] sm:$0xff]
      %v790 = vld [vmem:[%s782 + $0x38] sm:$0xff]
      %v792 = vsel %vm400, %v778, 0
      %v795 = vsel %vm400, %v779, 0
      %v798 = vsel %vm400, %v780, 0
      %v801 = vsel %vm400, %v781, 0
      %803 = vmatprep.subr.mxu0 %v784
      %804 = vmatpush1.msra.mxu0 %v783
      %805 = vmatprep.subr.mxu0 %v786
      %806 = vmatpush1.msra.mxu0 %v785
      %807 = vmatprep.subr.mxu0 %v788
      %808 = vmatpush1.msra.mxu0 %v787
      %809 = vmatprep.subr.mxu0 %v790
      %810 = vmatpush1.msra.mxu0 %v789
      %811 = vmatprep.subr.mxu0 0.0
      %812 = vmatpush1.msra.mxu0 0.0
      %813 = vmatprep.subr.mxu0 0.0
      %814 = vmatpush1.msra.mxu0 0.0
      %815 = vmatprep.subr.mxu0 0.0
      %816 = vmatpush1.msra.mxu0 0.0
      %817 = vmatprep.subr.mxu0 0.0
      %818 = vmatpush1.msra.mxu0 0.0
      %819 = vmatprep.subr.mxu0 0.0
      %820 = vmatpush1.msra.mxu0 0.0
      %821 = vmatprep.subr.mxu0 0.0
      %822 = vmatpush1.msra.mxu0 0.0
      %823 = vmatprep.subr.mxu0 0.0
      %824 = vmatpush1.msra.mxu0 0.0
      %825 = vmatprep.subr.mxu0 0.0
      %826 = vmatpush1.msra.mxu0 0.0
      %827 = vmatprep.subr.mxu0 0.0
      %828 = vmatpush1.msra.mxu0 0.0
      %829 = vmatprep.subr.mxu0 0.0
      %830 = vmatpush1.msra.mxu0 0.0
      %831 = vmatprep.subr.mxu0 0.0
      %832 = vmatpush1.msra.mxu0 0.0
      %833 = vmatprep.subr.mxu0 0.0
      %834 = vmatpush1.msra.mxu0 0.0
      %835 = vmatprep.subr.mxu0 0.0
      %836 = vmatpush1.msra.mxu0 0.0
      %837 = vmatprep.subr.mxu0 0.0
      %838 = vmatpush1.msra.mxu0 0.0
      %839 = vmatprep.subr.mxu0 0.0
      %840 = vmatpush1.msra.mxu0 0.0
      %841 = vmatprep.subr.mxu0 0.0
      %842 = vmatpush1.msra.mxu0 0.0
      %843 = vmatprep.subr.mxu0 0.0
      %844 = vmatpush1.msra.mxu0 0.0
      %845 = vmatprep.subr.mxu0 0.0
      %846 = vmatpush1.msra.mxu0 0.0
      %847 = vmatprep.subr.mxu0 0.0
      %848 = vmatpush1.msra.mxu0 0.0
      %849 = vmatprep.subr.mxu0 0.0
      %850 = vmatpush1.msra.mxu0 0.0
      %851 = vmatprep.subr.mxu0 0.0
      %852 = vmatpush1.msra.mxu0 0.0
      %853 = vmatprep.subr.mxu0 0.0
      %854 = vmatpush1.msra.mxu0 0.0
      %855 = vmatprep.subr.mxu0 0.0
      %856 = vmatpush1.msra.mxu0 0.0
      %857 = vmatprep.subr.mxu0 0.0
      %858 = vmatpush1.msra.mxu0 0.0
      %859 = vmatprep.subr.mxu0 0.0
      %860 = vmatpush1.msra.mxu0 0.0
      %861 = vmatprep.subr.mxu0 0.0
      %862 = vmatpush1.msra.mxu0 0.0
      %863 = vmatprep.subr.mxu0 0.0
      %864 = vmatpush1.msra.mxu0 0.0
      %865 = vmatprep.subr.mxu0 0.0
      %866 = vmatpush1.msra.mxu0 0.0
      %867 = vmatprep.mubr.f32.mxu0 0.0
      %868 = vmatmul.mubr.f32.gmra.mrb[0].mxu0 %v792
      %v869 = vpop.f32.mrb[0].mxu0
      %v870 = vadd.f32 0.0, %v869
      %v871 = vpop.f32.mrb[0].mxu0
      %v872 = vadd.f32 0.0, %v871
      %873 = vmatprep.mubr.f32.mxu0 0.0
      %874 = vmatmul.mubr.f32.gmra.mrb[0].mxu0 %v795
      %v875 = vpop.f32.mrb[0].mxu0
      %v876 = vadd.f32 0.0, %v875
      %v877 = vpop.f32.mrb[0].mxu0
      %v878 = vadd.f32 0.0, %v877
      %879 = vmatprep.mubr.f32.mxu0 0.0
      %880 = vmatmul.mubr.f32.gmra.mrb[0].mxu0 %v798
      %v881 = vpop.f32.mrb[0].mxu0
      %v882 = vadd.f32 0.0, %v881
      %v883 = vpop.f32.mrb[0].mxu0
      %v884 = vadd.f32 0.0, %v883
      %885 = vmatprep.mubr.f32.mxu0 0.0
      %886 = vmatmul.mubr.f32.gmra.mrb[0].mxu0 %v801
      %v887 = vpop.f32.mrb[0].mxu0
      %v888 = vadd.f32 0.0, %v887
      %v889 = vpop.f32.mrb[0].mxu0
      %v890 = vadd.f32 0.0, %v889
      %891 = vdwg.mxu0
      %v892 = vadd.f32 %v770, %v870
      %v893 = vadd.f32 %v771, %v872
      %v894 = vadd.f32 %v772, %v876
      %v895 = vadd.f32 %v773, %v878
      %v896 = vadd.f32 %v774, %v882
      %v897 = vadd.f32 %v775, %v884
      %v898 = vadd.f32 %v776, %v888
      %v899 = vadd.f32 %v777, %v890
      %v900 = vld [vmem:[%s399 + $0x1] sm:$0xff]
      %v901 = vld [vmem:[%s399 + $0x11] sm:$0xff]
      %v902 = vld [vmem:[%s399 + $0x21] sm:$0xff]
      %v903 = vld [vmem:[%s399 + $0x31] sm:$0xff]
      %s904 = scalar_lea.vmem %s4, 256
      %v905 = vld [vmem:[%s904] sm:$0xff]
      %v906 = vld [vmem:[%s904 + $0x8] sm:$0xff]
      %v907 = vld [vmem:[%s904 + $0x10] sm:$0xff]
      %v908 = vld [vmem:[%s904 + $0x18] sm:$0xff]
      %v909 = vld [vmem:[%s904 + $0x20] sm:$0xff]
      %v910 = vld [vmem:[%s904 + $0x28] sm:$0xff]
      %v911 = vld [vmem:[%s904 + $0x30] sm:$0xff]
      %v912 = vld [vmem:[%s904 + $0x38] sm:$0xff]
      %v914 = vsel %vm400, %v900, 0
      %v917 = vsel %vm400, %v901, 0
      %v920 = vsel %vm400, %v902, 0
      %v923 = vsel %vm400, %v903, 0
      %925 = vmatprep.subr.mxu0 %v906
      %926 = vmatpush1.msra.mxu0 %v905
      %927 = vmatprep.subr.mxu0 %v908
      %928 = vmatpush1.msra.mxu0 %v907
      %929 = vmatprep.subr.mxu0 %v910
      %930 = vmatpush1.msra.mxu0 %v909
      %931 = vmatprep.subr.mxu0 %v912
      %932 = vmatpush1.msra.mxu0 %v911
      %933 = vmatprep.subr.mxu0 0.0
      %934 = vmatpush1.msra.mxu0 0.0
      %935 = vmatprep.subr.mxu0 0.0
      %936 = vmatpush1.msra.mxu0 0.0
      %937 = vmatprep.subr.mxu0 0.0
      %938 = vmatpush1.msra.mxu0 0.0
      %939 = vmatprep.subr.mxu0 0.0
      %940 = vmatpush1.msra.mxu0 0.0
      %941 = vmatprep.subr.mxu0 0.0
      %942 = vmatpush1.msra.mxu0 0.0
      %943 = vmatprep.subr.mxu0 0.0
      %944 = vmatpush1.msra.mxu0 0.0
      %945 = vmatprep.subr.mxu0 0.0
      %946 = vmatpush1.msra.mxu0 0.0
      %947 = vmatprep.subr.mxu0 0.0
      %948 = vmatpush1.msra.mxu0 0.0
      %949 = vmatprep.subr.mxu0 0.0
      %950 = vmatpush1.msra.mxu0 0.0
      %951 = vmatprep.subr.mxu0 0.0
      %952 = vmatpush1.msra.mxu0 0.0
      %953 = vmatprep.subr.mxu0 0.0
      %954 = vmatpush1.msra.mxu0 0.0
      %955 = vmatprep.subr.mxu0 0.0
      %956 = vmatpush1.msra.mxu0 0.0
      %957 = vmatprep.subr.mxu0 0.0
      %958 = vmatpush1.msra.mxu0 0.0
      %959 = vmatprep.subr.mxu0 0.0
      %960 = vmatpush1.msra.mxu0 0.0
      %961 = vmatprep.subr.mxu0 0.0
      %962 = vmatpush1.msra.mxu0 0.0
      %963 = vmatprep.subr.mxu0 0.0
      %964 = vmatpush1.msra.mxu0 0.0
      %965 = vmatprep.subr.mxu0 0.0
      %966 = vmatpush1.msra.mxu0 0.0
      %967 = vmatprep.subr.mxu0 0.0
      %968 = vmatpush1.msra.mxu0 0.0
      %969 = vmatprep.subr.mxu0 0.0
      %970 = vmatpush1.msra.mxu0 0.0
      %971 = vmatprep.subr.mxu0 0.0
      %972 = vmatpush1.msra.mxu0 0.0
      %973 = vmatprep.subr.mxu0 0.0
      %974 = vmatpush1.msra.mxu0 0.0
      %975 = vmatprep.subr.mxu0 0.0
      %976 = vmatpush1.msra.mxu0 0.0
      %977 = vmatprep.subr.mxu0 0.0
      %978 = vmatpush1.msra.mxu0 0.0
      %979 = vmatprep.subr.mxu0 0.0
      %980 = vmatpush1.msra.mxu0 0.0
      %981 = vmatprep.subr.mxu0 0.0
      %982 = vmatpush1.msra.mxu0 0.0
      %983 = vmatprep.subr.mxu0 0.0
      %984 = vmatpush1.msra.mxu0 0.0
      %985 = vmatprep.subr.mxu0 0.0
      %986 = vmatpush1.msra.mxu0 0.0
      %987 = vmatprep.subr.mxu0 0.0
      %988 = vmatpush1.msra.mxu0 0.0
      %989 = vmatprep.mubr.f32.mxu0 0.0
      %990 = vmatmul.mubr.f32.gmra.mrb[0].mxu0 %v914
      %v991 = vpop.f32.mrb[0].mxu0
      %v992 = vadd.f32 0.0, %v991
      %v993 = vpop.f32.mrb[0].mxu0
      %v994 = vadd.f32 0.0, %v993
      %995 = vmatprep.mubr.f32.mxu0 0.0
      %996 = vmatmul.mubr.f32.gmra.mrb[0].mxu0 %v917
      %v997 = vpop.f32.mrb[0].mxu0
      %v998 = vadd.f32 0.0, %v997
      %v999 = vpop.f32.mrb[0].mxu0
      %v1000 = vadd.f32 0.0, %v999
      %1001 = vmatprep.mubr.f32.mxu0 0.0
      %1002 = vmatmul.mubr.f32.gmra.mrb[0].mxu0 %v920
      %v1003 = vpop.f32.mrb[0].mxu0
      %v1004 = vadd.f32 0.0, %v1003
      %v1005 = vpop.f32.mrb[0].mxu0
      %v1006 = vadd.f32 0.0, %v1005
      %1007 = vmatprep.mubr.f32.mxu0 0.0
      %1008 = vmatmul.mubr.f32.gmra.mrb[0].mxu0 %v923
      %v1009 = vpop.f32.mrb[0].mxu0
      %v1010 = vadd.f32 0.0, %v1009
      %v1011 = vpop.f32.mrb[0].mxu0
      %v1012 = vadd.f32 0.0, %v1011
      %1013 = vdwg.mxu0
      %v1014 = vadd.f32 %v892, %v992
      %v1015 = vadd.f32 %v893, %v994
      %v1016 = vadd.f32 %v894, %v998
      %v1017 = vadd.f32 %v895, %v1000
      %v1018 = vadd.f32 %v896, %v1004
      %v1019 = vadd.f32 %v897, %v1006
      %v1020 = vadd.f32 %v898, %v1010
      %v1021 = vadd.f32 %v899, %v1012
      %v1022 = vld [vmem:[%s399 + $0x2] sm:$0xff]
      %v1023 = vld [vmem:[%s399 + $0x12] sm:$0xff]
      %v1024 = vld [vmem:[%s399 + $0x22] sm:$0xff]
      %v1025 = vld [vmem:[%s399 + $0x32] sm:$0xff]
      %s1026 = scalar_lea.vmem %s4, 320
      %v1027 = vld [vmem:[%s1026] sm:$0xff]
      %v1028 = vld [vmem:[%s1026 + $0x8] sm:$0xff]
      %v1029 = vld [vmem:[%s1026 + $0x10] sm:$0xff]
      %v1030 = vld [vmem:[%s1026 + $0x18] sm:$0xff]
      %v1031 = vld [vmem:[%s1026 + $0x20] sm:$0xff]
      %v1032 = vld [vmem:[%s1026 + $0x28] sm:$0xff]
      %v1033 = vld [vmem:[%s1026 + $0x30] sm:$0xff]
      %v1034 = vld [vmem:[%s1026 + $0x38] sm:$0xff]
      %v1036 = vsel %vm400, %v1022, 0
      %v1039 = vsel %vm400, %v1023, 0
      %v1042 = vsel %vm400, %v1024, 0
      %v1045 = vsel %vm400, %v1025, 0
      %1047 = vmatprep.subr.mxu0 %v1028
      %1048 = vmatpush1.msra.mxu0 %v1027
      %1049 = vmatprep.subr.mxu0 %v1030
      %1050 = vmatpush1.msra.mxu0 %v1029
      %1051 = vmatprep.subr.mxu0 %v1032
      %1052 = vmatpush1.msra.mxu0 %v1031
      %1053 = vmatprep.subr.mxu0 %v1034
      %1054 = vmatpush1.msra.mxu0 %v1033
      %1055 = vmatprep.subr.mxu0 0.0
      %1056 = vmatpush1.msra.mxu0 0.0
      %1057 = vmatprep.subr.mxu0 0.0
      %1058 = vmatpush1.msra.mxu0 0.0
      %1059 = vmatprep.subr.mxu0 0.0
      %1060 = vmatpush1.msra.mxu0 0.0
      %1061 = vmatprep.subr.mxu0 0.0
      %1062 = vmatpush1.msra.mxu0 0.0
      %1063 = vmatprep.subr.mxu0 0.0
      %1064 = vmatpush1.msra.mxu0 0.0
      %1065 = vmatprep.subr.mxu0 0.0
      %1066 = vmatpush1.msra.mxu0 0.0
      %1067 = vmatprep.subr.mxu0 0.0
      %1068 = vmatpush1.msra.mxu0 0.0
      %1069 = vmatprep.subr.mxu0 0.0
      %1070 = vmatpush1.msra.mxu0 0.0
      %1071 = vmatprep.subr.mxu0 0.0
      %1072 = vmatpush1.msra.mxu0 0.0
      %1073 = vmatprep.subr.mxu0 0.0
      %1074 = vmatpush1.msra.mxu0 0.0
      %1075 = vmatprep.subr.mxu0 0.0
      %1076 = vmatpush1.msra.mxu0 0.0
      %1077 = vmatprep.subr.mxu0 0.0
      %1078 = vmatpush1.msra.mxu0 0.0
      %1079 = vmatprep.subr.mxu0 0.0
      %1080 = vmatpush1.msra.mxu0 0.0
      %1081 = vmatprep.subr.mxu0 0.0
      %1082 = vmatpush1.msra.mxu0 0.0
      %1083 = vmatprep.subr.mxu0 0.0
      %1084 = vmatpush1.msra.mxu0 0.0
      %1085 = vmatprep.subr.mxu0 0.0
      %1086 = vmatpush1.msra.mxu0 0.0
      %1087 = vmatprep.subr.mxu0 0.0
      %1088 = vmatpush1.msra.mxu0 0.0
      %1089 = vmatprep.subr.mxu0 0.0
      %1090 = vmatpush1.msra.mxu0 0.0
      %1091 = vmatprep.subr.mxu0 0.0
      %1092 = vmatpush1.msra.mxu0 0.0
      %1093 = vmatprep.subr.mxu0 0.0
      %1094 = vmatpush1.msra.mxu0 0.0
      %1095 = vmatprep.subr.mxu0 0.0
      %1096 = vmatpush1.msra.mxu0 0.0
      %1097 = vmatprep.subr.mxu0 0.0
      %1098 = vmatpush1.msra.mxu0 0.0
      %1099 = vmatprep.subr.mxu0 0.0
      %1100 = vmatpush1.msra.mxu0 0.0
      %1101 = vmatprep.subr.mxu0 0.0
      %1102 = vmatpush1.msra.mxu0 0.0
      %1103 = vmatprep.subr.mxu0 0.0
      %1104 = vmatpush1.msra.mxu0 0.0
      %1105 = vmatprep.subr.mxu0 0.0
      %1106 = vmatpush1.msra.mxu0 0.0
      %1107 = vmatprep.subr.mxu0 0.0
      %1108 = vmatpush1.msra.mxu0 0.0
      %1109 = vmatprep.subr.mxu0 0.0
      %1110 = vmatpush1.msra.mxu0 0.0
      %1111 = vmatprep.mubr.f32.mxu0 0.0
      %1112 = vmatmul.mubr.f32.gmra.mrb[0].mxu0 %v1036
      %v1113 = vpop.f32.mrb[0].mxu0
      %v1114 = vadd.f32 0.0, %v1113
      %v1115 = vpop.f32.mrb[0].mxu0
      %v1116 = vadd.f32 0.0, %v1115
      %1117 = vmatprep.mubr.f32.mxu0 0.0
      %1118 = vmatmul.mubr.f32.gmra.mrb[0].mxu0 %v1039
      %v1119 = vpop.f32.mrb[0].mxu0
      %v1120 = vadd.f32 0.0, %v1119
      %v1121 = vpop.f32.mrb[0].mxu0
      %v1122 = vadd.f32 0.0, %v1121
      %1123 = vmatprep.mubr.f32.mxu0 0.0
      %1124 = vmatmul.mubr.f32.gmra.mrb[0].mxu0 %v1042
      %v1125 = vpop.f32.mrb[0].mxu0
      %v1126 = vadd.f32 0.0, %v1125
      %v1127 = vpop.f32.mrb[0].mxu0
      %v1128 = vadd.f32 0.0, %v1127
      %1129 = vmatprep.mubr.f32.mxu0 0.0
      %1130 = vmatmul.mubr.f32.gmra.mrb[0].mxu0 %v1045
      %v1131 = vpop.f32.mrb[0].mxu0
      %v1132 = vadd.f32 0.0, %v1131
      %v1133 = vpop.f32.mrb[0].mxu0
      %v1134 = vadd.f32 0.0, %v1133
      %1135 = vdwg.mxu0
      %v1136 = vadd.f32 %v1014, %v1114
      %v1137 = vadd.f32 %v1015, %v1116
      %v1138 = vadd.f32 %v1016, %v1120
      %v1139 = vadd.f32 %v1017, %v1122
      %v1140 = vadd.f32 %v1018, %v1126
      %v1141 = vadd.f32 %v1019, %v1128
      %v1142 = vadd.f32 %v1020, %v1132
      %v1143 = vadd.f32 %v1021, %v1134
      %s1144 = scalar_lea.vmem [#allocation2], 32
      %v1145 = vld [vmem:[%s1144] sm:$0xff]
      %v1146 = vld [vmem:[%s1144 + $0x10] sm:$0xff]
      %v1147 = vld [vmem:[%s1144 + $0x20] sm:$0xff]
      %v1148 = vld [vmem:[%s1144 + $0x30] sm:$0xff]
      %s1149 = scalar_lea.vmem %s4, 384
      %v1150 = vld [vmem:[%s1149] sm:$0xff]
      %v1151 = vld [vmem:[%s1149 + $0x8] sm:$0xff]
      %v1152 = vld [vmem:[%s1149 + $0x10] sm:$0xff]
      %v1153 = vld [vmem:[%s1149 + $0x18] sm:$0xff]
      %v1154 = vld [vmem:[%s1149 + $0x20] sm:$0xff]
      %v1155 = vld [vmem:[%s1149 + $0x28] sm:$0xff]
      %v1156 = vld [vmem:[%s1149 + $0x30] sm:$0xff]
      %v1157 = vld [vmem:[%s1149 + $0x38] sm:$0xff]
      %v1159 = vsel %vm400, %v1145, 0
      %v1162 = vsel %vm400, %v1146, 0
      %v1165 = vsel %vm400, %v1147, 0
      %v1168 = vsel %vm400, %v1148, 0
      %1170 = vmatprep.subr.mxu0 %v1151
      %1171 = vmatpush1.msra.mxu0 %v1150
      %1172 = vmatprep.subr.mxu0 %v1153
      %1173 = vmatpush1.msra.mxu0 %v1152
      %1174 = vmatprep.subr.mxu0 %v1155
      %1175 = vmatpush1.msra.mxu0 %v1154
      %1176 = vmatprep.subr.mxu0 %v1157
      %1177 = vmatpush1.msra.mxu0 %v1156
      %1178 = vmatprep.subr.mxu0 0.0
      %1179 = vmatpush1.msra.mxu0 0.0
      %1180 = vmatprep.subr.mxu0 0.0
      %1181 = vmatpush1.msra.mxu0 0.0
      %1182 = vmatprep.subr.mxu0 0.0
      %1183 = vmatpush1.msra.mxu0 0.0
      %1184 = vmatprep.subr.mxu0 0.0
      %1185 = vmatpush1.msra.mxu0 0.0
      %1186 = vmatprep.subr.mxu0 0.0
      %1187 = vmatpush1.msra.mxu0 0.0
      %1188 = vmatprep.subr.mxu0 0.0
      %1189 = vmatpush1.msra.mxu0 0.0
      %1190 = vmatprep.subr.mxu0 0.0
      %1191 = vmatpush1.msra.mxu0 0.0
      %1192 = vmatprep.subr.mxu0 0.0
      %1193 = vmatpush1.msra.mxu0 0.0
      %1194 = vmatprep.subr.mxu0 0.0
      %1195 = vmatpush1.msra.mxu0 0.0
      %1196 = vmatprep.subr.mxu0 0.0
      %1197 = vmatpush1.msra.mxu0 0.0
      %1198 = vmatprep.subr.mxu0 0.0
      %1199 = vmatpush1.msra.mxu0 0.0
      %1200 = vmatprep.subr.mxu0 0.0
      %1201 = vmatpush1.msra.mxu0 0.0
      %1202 = vmatprep.subr.mxu0 0.0
      %1203 = vmatpush1.msra.mxu0 0.0
      %1204 = vmatprep.subr.mxu0 0.0
      %1205 = vmatpush1.msra.mxu0 0.0
      %1206 = vmatprep.subr.mxu0 0.0
      %1207 = vmatpush1.msra.mxu0 0.0
      %1208 = vmatprep.subr.mxu0 0.0
      %1209 = vmatpush1.msra.mxu0 0.0
      %1210 = vmatprep.subr.mxu0 0.0
      %1211 = vmatpush1.msra.mxu0 0.0
      %1212 = vmatprep.subr.mxu0 0.0
      %1213 = vmatpush1.msra.mxu0 0.0
      %1214 = vmatprep.subr.mxu0 0.0
      %1215 = vmatpush1.msra.mxu0 0.0
      %1216 = vmatprep.subr.mxu0 0.0
      %1217 = vmatpush1.msra.mxu0 0.0
      %1218 = vmatprep.subr.mxu0 0.0
      %1219 = vmatpush1.msra.mxu0 0.0
      %1220 = vmatprep.subr.mxu0 0.0
      %1221 = vmatpush1.msra.mxu0 0.0
      %1222 = vmatprep.subr.mxu0 0.0
      %1223 = vmatpush1.msra.mxu0 0.0
      %1224 = vmatprep.subr.mxu0 0.0
      %1225 = vmatpush1.msra.mxu0 0.0
      %1226 = vmatprep.subr.mxu0 0.0
      %1227 = vmatpush1.msra.mxu0 0.0
      %1228 = vmatprep.subr.mxu0 0.0
      %1229 = vmatpush1.msra.mxu0 0.0
      %1230 = vmatprep.subr.mxu0 0.0
      %1231 = vmatpush1.msra.mxu0 0.0
      %1232 = vmatprep.subr.mxu0 0.0
      %1233 = vmatpush1.msra.mxu0 0.0
      %1234 = vmatprep.mubr.f32.mxu0 0.0
      %1235 = vmatmul.mubr.f32.gmra.mrb[0].mxu0 %v1159
      %v1236 = vpop.f32.mrb[0].mxu0
      %v1237 = vadd.f32 0.0, %v1236
      %v1238 = vpop.f32.mrb[0].mxu0
      %v1239 = vadd.f32 0.0, %v1238
      %1240 = vmatprep.mubr.f32.mxu0 0.0
      %1241 = vmatmul.mubr.f32.gmra.mrb[0].mxu0 %v1162
      %v1242 = vpop.f32.mrb[0].mxu0
      %v1243 = vadd.f32 0.0, %v1242
      %v1244 = vpop.f32.mrb[0].mxu0
      %v1245 = vadd.f32 0.0, %v1244
      %1246 = vmatprep.mubr.f32.mxu0 0.0
      %1247 = vmatmul.mubr.f32.gmra.mrb[0].mxu0 %v1165
      %v1248 = vpop.f32.mrb[0].mxu0
      %v1249 = vadd.f32 0.0, %v1248
      %v1250 = vpop.f32.mrb[0].mxu0
      %v1251 = vadd.f32 0.0, %v1250
      %1252 = vmatprep.mubr.f32.mxu0 0.0
      %1253 = vmatmul.mubr.f32.gmra.mrb[0].mxu0 %v1168
      %v1254 = vpop.f32.mrb[0].mxu0
      %v1255 = vadd.f32 0.0, %v1254
      %v1256 = vpop.f32.mrb[0].mxu0
      %v1257 = vadd.f32 0.0, %v1256
      %1258 = vdwg.mxu0
      %v1259 = vadd.f32 %v1136, %v1237
      %v1260 = vadd.f32 %v1137, %v1239
      %v1261 = vadd.f32 %v1138, %v1243
      %v1262 = vadd.f32 %v1139, %v1245
      %v1263 = vadd.f32 %v1140, %v1249
      %v1264 = vadd.f32 %v1141, %v1251
      %v1265 = vadd.f32 %v1142, %v1255
      %v1266 = vadd.f32 %v1143, %v1257
      %v1267 = vld [vmem:[%s1144 + $0x1] sm:$0xff]
      %v1268 = vld [vmem:[%s1144 + $0x11] sm:$0xff]
      %v1269 = vld [vmem:[%s1144 + $0x21] sm:$0xff]
      %v1270 = vld [vmem:[%s1144 + $0x31] sm:$0xff]
      %s1271 = scalar_lea.vmem %s4, 448
      %v1272 = vld [vmem:[%s1271] sm:$0xff]
      %v1273 = vld [vmem:[%s1271 + $0x8] sm:$0xff]
      %v1274 = vld [vmem:[%s1271 + $0x10] sm:$0xff]
      %v1275 = vld [vmem:[%s1271 + $0x18] sm:$0xff]
      %v1276 = vld [vmem:[%s1271 + $0x20] sm:$0xff]
      %v1277 = vld [vmem:[%s1271 + $0x28] sm:$0xff]
      %v1278 = vld [vmem:[%s1271 + $0x30] sm:$0xff]
      %v1279 = vld [vmem:[%s1271 + $0x38] sm:$0xff]
      %v1281 = vsel %vm400, %v1267, 0
      %v1284 = vsel %vm400, %v1268, 0
      %v1287 = vsel %vm400, %v1269, 0
      %v1290 = vsel %vm400, %v1270, 0
      %1292 = vmatprep.subr.mxu0 %v1273
      %1293 = vmatpush1.msra.mxu0 %v1272
      %1294 = vmatprep.subr.mxu0 %v1275
      %1295 = vmatpush1.msra.mxu0 %v1274
      %1296 = vmatprep.subr.mxu0 %v1277
      %1297 = vmatpush1.msra.mxu0 %v1276
      %1298 = vmatprep.subr.mxu0 %v1279
      %1299 = vmatpush1.msra.mxu0 %v1278
      %1300 = vmatprep.subr.mxu0 0.0
      %1301 = vmatpush1.msra.mxu0 0.0
      %1302 = vmatprep.subr.mxu0 0.0
      %1303 = vmatpush1.msra.mxu0 0.0
      %1304 = vmatprep.subr.mxu0 0.0
      %1305 = vmatpush1.msra.mxu0 0.0
      %1306 = vmatprep.subr.mxu0 0.0
      %1307 = vmatpush1.msra.mxu0 0.0
      %1308 = vmatprep.subr.mxu0 0.0
      %1309 = vmatpush1.msra.mxu0 0.0
      %1310 = vmatprep.subr.mxu0 0.0
      %1311 = vmatpush1.msra.mxu0 0.0
      %1312 = vmatprep.subr.mxu0 0.0
      %1313 = vmatpush1.msra.mxu0 0.0
      %1314 = vmatprep.subr.mxu0 0.0
      %1315 = vmatpush1.msra.mxu0 0.0
      %1316 = vmatprep.subr.mxu0 0.0
      %1317 = vmatpush1.msra.mxu0 0.0
      %1318 = vmatprep.subr.mxu0 0.0
      %1319 = vmatpush1.msra.mxu0 0.0
      %1320 = vmatprep.subr.mxu0 0.0
      %1321 = vmatpush1.msra.mxu0 0.0
      %1322 = vmatprep.subr.mxu0 0.0
      %1323 = vmatpush1.msra.mxu0 0.0
      %1324 = vmatprep.subr.mxu0 0.0
      %1325 = vmatpush1.msra.mxu0 0.0
      %1326 = vmatprep.subr.mxu0 0.0
      %1327 = vmatpush1.msra.mxu0 0.0
      %1328 = vmatprep.subr.mxu0 0.0
      %1329 = vmatpush1.msra.mxu0 0.0
      %1330 = vmatprep.subr.mxu0 0.0
      %1331 = vmatpush1.msra.mxu0 0.0
      %1332 = vmatprep.subr.mxu0 0.0
      %1333 = vmatpush1.msra.mxu0 0.0
      %1334 = vmatprep.subr.mxu0 0.0
      %1335 = vmatpush1.msra.mxu0 0.0
      %1336 = vmatprep.subr.mxu0 0.0
      %1337 = vmatpush1.msra.mxu0 0.0
      %1338 = vmatprep.subr.mxu0 0.0
      %1339 = vmatpush1.msra.mxu0 0.0
      %1340 = vmatprep.subr.mxu0 0.0
      %1341 = vmatpush1.msra.mxu0 0.0
      %1342 = vmatprep.subr.mxu0 0.0
      %1343 = vmatpush1.msra.mxu0 0.0
      %1344 = vmatprep.subr.mxu0 0.0
      %1345 = vmatpush1.msra.mxu0 0.0
      %1346 = vmatprep.subr.mxu0 0.0
      %1347 = vmatpush1.msra.mxu0 0.0
      %1348 = vmatprep.subr.mxu0 0.0
      %1349 = vmatpush1.msra.mxu0 0.0
      %1350 = vmatprep.subr.mxu0 0.0
      %1351 = vmatpush1.msra.mxu0 0.0
      %1352 = vmatprep.subr.mxu0 0.0
      %1353 = vmatpush1.msra.mxu0 0.0
      %1354 = vmatprep.subr.mxu0 0.0
      %1355 = vmatpush1.msra.mxu0 0.0
      %1356 = vmatprep.mubr.f32.mxu0 0.0
      %1357 = vmatmul.mubr.f32.gmra.mrb[0].mxu0 %v1281
      %v1358 = vpop.f32.mrb[0].mxu0
      %v1359 = vadd.f32 0.0, %v1358
      %v1360 = vpop.f32.mrb[0].mxu0
      %v1361 = vadd.f32 0.0, %v1360
      %1362 = vmatprep.mubr.f32.mxu0 0.0
      %1363 = vmatmul.mubr.f32.gmra.mrb[0].mxu0 %v1284
      %v1364 = vpop.f32.mrb[0].mxu0
      %v1365 = vadd.f32 0.0, %v1364
      %v1366 = vpop.f32.mrb[0].mxu0
      %v1367 = vadd.f32 0.0, %v1366
      %1368 = vmatprep.mubr.f32.mxu0 0.0
      %1369 = vmatmul.mubr.f32.gmra.mrb[0].mxu0 %v1287
      %v1370 = vpop.f32.mrb[0].mxu0
      %v1371 = vadd.f32 0.0, %v1370
      %v1372 = vpop.f32.mrb[0].mxu0
      %v1373 = vadd.f32 0.0, %v1372
      %1374 = vmatprep.mubr.f32.mxu0 0.0
      %1375 = vmatmul.mubr.f32.gmra.mrb[0].mxu0 %v1290
      %v1376 = vpop.f32.mrb[0].mxu0
      %v1377 = vadd.f32 0.0, %v1376
      %v1378 = vpop.f32.mrb[0].mxu0
      %v1379 = vadd.f32 0.0, %v1378
      %1380 = vdwg.mxu0
      %v1381 = vadd.f32 %v1259, %v1359
      %v1382 = vadd.f32 %v1260, %v1361
      %v1383 = vadd.f32 %v1261, %v1365
      %v1384 = vadd.f32 %v1262, %v1367
      %v1385 = vadd.f32 %v1263, %v1371
      %v1386 = vadd.f32 %v1264, %v1373
      %v1387 = vadd.f32 %v1265, %v1377
      %v1388 = vadd.f32 %v1266, %v1379
      %v1389 = vld [vmem:[%s1144 + $0x2] sm:$0xff]
      %v1390 = vld [vmem:[%s1144 + $0x12] sm:$0xff]
      %v1391 = vld [vmem:[%s1144 + $0x22] sm:$0xff]
      %v1392 = vld [vmem:[%s1144 + $0x32] sm:$0xff]
      %s1393 = scalar_lea.vmem %s4, 512
      %v1394 = vld [vmem:[%s1393] sm:$0xff]
      %v1395 = vld [vmem:[%s1393 + $0x8] sm:$0xff]
      %v1396 = vld [vmem:[%s1393 + $0x10] sm:$0xff]
      %v1397 = vld [vmem:[%s1393 + $0x18] sm:$0xff]
      %v1398 = vld [vmem:[%s1393 + $0x20] sm:$0xff]
      %v1399 = vld [vmem:[%s1393 + $0x28] sm:$0xff]
      %v1400 = vld [vmem:[%s1393 + $0x30] sm:$0xff]
      %v1401 = vld [vmem:[%s1393 + $0x38] sm:$0xff]
      %v1403 = vsel %vm400, %v1389, 0
      %v1406 = vsel %vm400, %v1390, 0
      %v1409 = vsel %vm400, %v1391, 0
      %v1412 = vsel %vm400, %v1392, 0
      %1414 = vmatprep.subr.mxu0 %v1395
      %1415 = vmatpush1.msra.mxu0 %v1394
      %1416 = vmatprep.subr.mxu0 %v1397
      %1417 = vmatpush1.msra.mxu0 %v1396
      %1418 = vmatprep.subr.mxu0 %v1399
      %1419 = vmatpush1.msra.mxu0 %v1398
      %1420 = vmatprep.subr.mxu0 %v1401
      %1421 = vmatpush1.msra.mxu0 %v1400
      %1422 = vmatprep.subr.mxu0 0.0
      %1423 = vmatpush1.msra.mxu0 0.0
      %1424 = vmatprep.subr.mxu0 0.0
      %1425 = vmatpush1.msra.mxu0 0.0
      %1426 = vmatprep.subr.mxu0 0.0
      %1427 = vmatpush1.msra.mxu0 0.0
      %1428 = vmatprep.subr.mxu0 0.0
      %1429 = vmatpush1.msra.mxu0 0.0
      %1430 = vmatprep.subr.mxu0 0.0
      %1431 = vmatpush1.msra.mxu0 0.0
      %1432 = vmatprep.subr.mxu0 0.0
      %1433 = vmatpush1.msra.mxu0 0.0
      %1434 = vmatprep.subr.mxu0 0.0
      %1435 = vmatpush1.msra.mxu0 0.0
      %1436 = vmatprep.subr.mxu0 0.0
      %1437 = vmatpush1.msra.mxu0 0.0
      %1438 = vmatprep.subr.mxu0 0.0
      %1439 = vmatpush1.msra.mxu0 0.0
      %1440 = vmatprep.subr.mxu0 0.0
      %1441 = vmatpush1.msra.mxu0 0.0
      %1442 = vmatprep.subr.mxu0 0.0
      %1443 = vmatpush1.msra.mxu0 0.0
      %1444 = vmatprep.subr.mxu0 0.0
      %1445 = vmatpush1.msra.mxu0 0.0
      %1446 = vmatprep.subr.mxu0 0.0
      %1447 = vmatpush1.msra.mxu0 0.0
      %1448 = vmatprep.subr.mxu0 0.0
      %1449 = vmatpush1.msra.mxu0 0.0
      %1450 = vmatprep.subr.mxu0 0.0
      %1451 = vmatpush1.msra.mxu0 0.0
      %1452 = vmatprep.subr.mxu0 0.0
      %1453 = vmatpush1.msra.mxu0 0.0
      %1454 = vmatprep.subr.mxu0 0.0
      %1455 = vmatpush1.msra.mxu0 0.0
      %1456 = vmatprep.subr.mxu0 0.0
      %1457 = vmatpush1.msra.mxu0 0.0
      %1458 = vmatprep.subr.mxu0 0.0
      %1459 = vmatpush1.msra.mxu0 0.0
      %1460 = vmatprep.subr.mxu0 0.0
      %1461 = vmatpush1.msra.mxu0 0.0
      %1462 = vmatprep.subr.mxu0 0.0
      %1463 = vmatpush1.msra.mxu0 0.0
      %1464 = vmatprep.subr.mxu0 0.0
      %1465 = vmatpush1.msra.mxu0 0.0
      %1466 = vmatprep.subr.mxu0 0.0
      %1467 = vmatpush1.msra.mxu0 0.0
      %1468 = vmatprep.subr.mxu0 0.0
      %1469 = vmatpush1.msra.mxu0 0.0
      %1470 = vmatprep.subr.mxu0 0.0
      %1471 = vmatpush1.msra.mxu0 0.0
      %1472 = vmatprep.subr.mxu0 0.0
      %1473 = vmatpush1.msra.mxu0 0.0
      %1474 = vmatprep.subr.mxu0 0.0
      %1475 = vmatpush1.msra.mxu0 0.0
      %1476 = vmatprep.subr.mxu0 0.0
      %1477 = vmatpush1.msra.mxu0 0.0
      %1478 = vmatprep.mubr.f32.mxu0 0.0
      %1479 = vmatmul.mubr.f32.gmra.mrb[0].mxu0 %v1403
      %v1480 = vpop.f32.mrb[0].mxu0
      %v1481 = vadd.f32 0.0, %v1480
      %v1482 = vpop.f32.mrb[0].mxu0
      %v1483 = vadd.f32 0.0, %v1482
      %1484 = vmatprep.mubr.f32.mxu0 0.0
      %1485 = vmatmul.mubr.f32.gmra.mrb[0].mxu0 %v1406
      %v1486 = vpop.f32.mrb[0].mxu0
      %v1487 = vadd.f32 0.0, %v1486
      %v1488 = vpop.f32.mrb[0].mxu0
      %v1489 = vadd.f32 0.0, %v1488
      %1490 = vmatprep.mubr.f32.mxu0 0.0
      %1491 = vmatmul.mubr.f32.gmra.mrb[0].mxu0 %v1409
      %v1492 = vpop.f32.mrb[0].mxu0
      %v1493 = vadd.f32 0.0, %v1492
      %v1494 = vpop.f32.mrb[0].mxu0
      %v1495 = vadd.f32 0.0, %v1494
      %1496 = vmatprep.mubr.f32.mxu0 0.0
      %1497 = vmatmul.mubr.f32.gmra.mrb[0].mxu0 %v1412
      %v1498 = vpop.f32.mrb[0].mxu0
      %v1499 = vadd.f32 0.0, %v1498
      %v1500 = vpop.f32.mrb[0].mxu0
      %v1501 = vadd.f32 0.0, %v1500
      %1502 = vdwg.mxu0
      %v1503 = vadd.f32 %v1381, %v1481
      %v1504 = vadd.f32 %v1382, %v1483
      %v1505 = vadd.f32 %v1383, %v1487
      %v1506 = vadd.f32 %v1384, %v1489
      %v1507 = vadd.f32 %v1385, %v1493
      %v1508 = vadd.f32 %v1386, %v1495
      %v1509 = vadd.f32 %v1387, %v1499
      %v1510 = vadd.f32 %v1388, %v1501
      %v1511 = vld [vmem:[%s0] sm:$0xff]
      %v1512 = vld [vmem:[%s0 + $0x8] sm:$0xff]
      %v1513 = vld [vmem:[%s0 + $0x10] sm:$0xff]
      %v1514 = vld [vmem:[%s0 + $0x18] sm:$0xff]
      %1516 = vset.pattern.permute.xlu0 0
      %1517 = vperm.xlu0 %1516, %v1511
      %v1518 = vpop.permute.xlu0 %1517
      %1521 = vset.pattern.permute.xlu0 0
      %1522 = vperm.xlu0 %1521, %v1512
      %v1523 = vpop.permute.xlu0 %1522
      %1526 = vset.pattern.permute.xlu0 0
      %1527 = vperm.xlu0 %1526, %v1513
      %v1528 = vpop.permute.xlu0 %1527
      %1531 = vset.pattern.permute.xlu0 0
      %1532 = vperm.xlu0 %1531, %v1514
      %v1533 = vpop.permute.xlu0 %1532
      %v1535 = vmul.f32 %v1518, %v1504
      %v1536 = vmul.f32 %v1523, %v1506
      %v1537 = vmul.f32 %v1528, %v1508
      %v1538 = vmul.f32 %v1533, %v1510
      %1543 = vrot.lane.b32.xlu0 %v1535, 64
      %v1544 = vpop.permute.xlu0 %1543
      %1545 = vrot.lane.b32.xlu0 %v1536, 64
      %v1546 = vpop.permute.xlu0 %1545
      %1547 = vrot.lane.b32.xlu0 %v1537, 64
      %v1548 = vpop.permute.xlu0 %1547
      %1549 = vrot.lane.b32.xlu0 %v1538, 64
      %v1550 = vpop.permute.xlu0 %1549
      %v1555 = vsub.f32 %v1503, %v1544
      %v1556 = vsub.f32 %v1505, %v1546
      %v1557 = vsub.f32 %v1507, %v1548
      %v1558 = vsub.f32 %v1509, %v1550
      %1559 = vset.pattern.permute.xlu0 1
      %1560 = vperm.xlu0 %1559, %v1511
      %v1561 = vpop.permute.xlu0 %1560
      %1563 = vset.pattern.permute.xlu0 1
      %1564 = vperm.xlu0 %1563, %v1512
      %v1565 = vpop.permute.xlu0 %1564
      %1567 = vset.pattern.permute.xlu0 1
      %1568 = vperm.xlu0 %1567, %v1513
      %v1569 = vpop.permute.xlu0 %1568
      %1571 = vset.pattern.permute.xlu0 1
      %1572 = vperm.xlu0 %1571, %v1514
      %v1573 = vpop.permute.xlu0 %1572
      %v1575 = vmul.f32 %v1561, %v1504
      %v1576 = vmul.f32 %v1565, %v1506
      %v1577 = vmul.f32 %v1569, %v1508
      %v1578 = vmul.f32 %v1573, %v1510
      %v1579 = vsub.f32 %v1555, %v1575
      %v1580 = vsub.f32 %v1556, %v1576
      %v1581 = vsub.f32 %v1557, %v1577
      %v1582 = vsub.f32 %v1558, %v1578
      %vm1583 = vcmp.ge.f32.partialorder %v1503, 0.0
      %vm1584 = vcmp.ge.f32.partialorder %v1505, 0.0
      %vm1585 = vcmp.ge.f32.partialorder %v1507, 0.0
      %vm1586 = vcmp.ge.f32.partialorder %v1509, 0.0
      %v1587 = vmul.f32 %v1503, 0.01
      %v1588 = vmul.f32 %v1505, 0.01
      %v1589 = vmul.f32 %v1507, 0.01
      %v1590 = vmul.f32 %v1509, 0.01
      %v1591 = vsel %vm1583, %v1503, %v1587
      %v1592 = vsel %vm1584, %v1505, %v1588
      %v1593 = vsel %vm1585, %v1507, %v1589
      %v1594 = vsel %vm1586, %v1509, %v1590
      %vm1595 = vcmp.ge.f32.partialorder %v1579, 0.0
      %vm1596 = vcmp.ge.f32.partialorder %v1580, 0.0
      %vm1597 = vcmp.ge.f32.partialorder %v1581, 0.0
      %vm1598 = vcmp.ge.f32.partialorder %v1582, 0.0
      %v1599 = vmul.f32 %v1579, 0.01
      %v1600 = vmul.f32 %v1580, 0.01
      %v1601 = vmul.f32 %v1581, 0.01
      %v1602 = vmul.f32 %v1582, 0.01
      %v1603 = vsel %vm1595, %v1579, %v1599
      %v1604 = vsel %vm1596, %v1580, %v1600
      %v1605 = vsel %vm1597, %v1581, %v1601
      %v1606 = vsel %vm1598, %v1582, %v1602
      %1611 = vrot.lane.b32.xlu0 %v1603, 64
      %v1612 = vpop.permute.xlu0 %1611
      %1613 = vrot.lane.b32.xlu0 %v1604, 64
      %v1614 = vpop.permute.xlu0 %1613
      %1615 = vrot.lane.b32.xlu0 %v1605, 64
      %v1616 = vpop.permute.xlu0 %1615
      %1617 = vrot.lane.b32.xlu0 %v1606, 64
      %v1618 = vpop.permute.xlu0 %1617
      %v1623 = vadd.f32 %v1591, %v1612
      %v1624 = vadd.f32 %v1592, %v1614
      %v1625 = vadd.f32 %v1593, %v1616
      %v1626 = vadd.f32 %v1594, %v1618
      %vm1627 = vcmask 523264
      %1628 = vst.msk [vmem:[%s380] sm:$0xff] %vm1627, %v1623
      %1629 = vst.msk [vmem:[%s380 + $0x8] sm:$0xff] %vm1627, %v1624
      %1630 = vst.msk [vmem:[%s380 + $0x10] sm:$0xff] %vm1627, %v1625
      %1631 = vst.msk [vmem:[%s380 + $0x18] sm:$0xff] %vm1627, %v1626
      %s1632 = smul.u32 4, %s21
      %p1633 = scmp.lt.s32.totalorder %s20, 1
      %s1634 = scalar_select %p1633, %s20, 1
      %p1635 = scmp.lt.s32.totalorder %s1632, 7
      %s1636 = scalar_select %p1635, %s1632, 7
      %s1637 = smul.addr %s1634, 8
      %s1638 = sadd.s32 %s1636, %s1637
      %s1639 = smul.addr %s1638, 8
      %s1640 = scalar_lea.vmem %s5, %s1639
      // Predicated region
      $region57: #{sequence_block_forward.1} parent=39 // pred_check
        %p1641 = pneg %p190
      $region58: #{sequence_block_forward.1} parent=39 // pred_check_branch
        %1643 = sbr.rel (%p1641) target = $region60
      $region59: #{sequence_block_forward.1} parent=39 // pred_region
        %s1644 = smul.u32 4, %s21
      $region60: #{sequence_block_forward.1} parent=39 // pred_fallthru
        _
    $region40: #{sequence_block_forward.1} parent=5 // pred_fallthru
      _
    %p1645 = scmp.le.s32.totalorder 2, %s11
    // Predicated region
    $region61: #{sequence_block_forward.1} parent=5 // pred_check
      %p1646 = pneg %p1645
    $region62: #{sequence_block_forward.1} parent=5 // pred_check_branch
      %1648 = sbr.rel (%p1646) target = $region64
    $region63: #{sequence_block_forward.1} parent=5 // pred_region
      %s1649 = ssub.s32 %s11, 2
      // Predicated region
      $region65: #{sequence_block_forward.1} parent=63 // pred_check
        %p1650 = pneg %p196
      $region66: #{sequence_block_forward.1} parent=63 // pred_check_branch
        %1652 = sbr.rel (%p1650) target = $region68
      $region67: #{sequence_block_forward.1} parent=63 // pred_region
        %s1653 = smul.u32 4, %s23
        %p1654 = scmp.lt.s32.totalorder %s22, 1
        %s1655 = scalar_select %p1654, %s22, 1
        %p1656 = scmp.lt.s32.totalorder %s1653, 7
        %s1657 = scalar_select %p1656, %s1653, 7
        %s1658 = smul.addr %s1655, 8
        %s1659 = sadd.s32 %s1657, %s1658
        %s1660 = smul.addr %s1659, 8
        %s1661 = scalar_lea.vmem %s5, %s1660
      $region68: #{sequence_block_forward.1} parent=63 // pred_fallthru
        _
    $region64: #{sequence_block_forward.1} parent=5 // pred_fallthru
      _
  $region6: #{sequence_block_forward.1} parent=0 // loop_footer
    %s15 = sadd.s32 1, %s11
  $region7: #{sequence_block_forward.1} parent=0 // loop_footer_branch
    %10 = sbr.rel target = $region3
  $region8: #{sequence_block_forward.1} parent=0 // loop_exit
    _

</llo_original>
